<compile_context>
chip_gen: v6e
topology: v6e:2x2x1
jax: 0.10.0
libtpu: 0.0.40
codegen_flags: <defaults>
</compile_context>

<pallas_src>
import functools

import jax
import jax.numpy as jnp
from jax.experimental import pallas as pl
from jax.experimental.pallas import tpu as pltpu

_LANE = 128      # lane width: pad K and Cout to multiples of this
_TM_MAX = 512    # M-tile (rows of im2col patches) for pipelined matmuls
_VMEM_LIMIT = 48 * 1024 * 1024


# ----------------------------------------------------------------------------
# Pallas kernels
# ----------------------------------------------------------------------------

def _conv_bias_lrelu_kernel(p_ref, w_ref, b_ref, o_ref):
    # y = patches_tile @ W + b ; LeakyReLU(0.2)
    y = jnp.dot(p_ref[...], w_ref[...], preferred_element_type=jnp.float32)
    y = y + b_ref[...]
    o_ref[...] = jnp.maximum(y, 0.2 * y)


def _conv_bias_kernel(p_ref, w_ref, b_ref, o_ref):
    # Final projection: y = patches_tile @ W + b (no activation).
    y = jnp.dot(p_ref[...], w_ref[...], preferred_element_type=jnp.float32)
    o_ref[...] = y + b_ref[...]


def _conv_stats_kernel(p_ref, w_ref, y_ref, s_ref):
    # Conv matmul for BN layers: emit y (f32) and per-tile partial per-channel
    # sum / sum-of-squares (rows 0 and 1 of an (8, Cp) stats block).  Padded
    # (zero) patch rows contribute nothing, so stats stay exact under padding.
    y = jnp.dot(p_ref[...], w_ref[...], preferred_element_type=jnp.float32)
    y_ref[...] = y
    cp = y.shape[1]
    ssum = jnp.sum(y, axis=0, keepdims=True)
    ssq = jnp.sum(y * y, axis=0, keepdims=True)
    s_ref[...] = jnp.concatenate(
        [ssum, ssq, jnp.zeros((6, cp), jnp.float32)], axis=0)


def _bn_lrelu_kernel(y_ref, scale_ref, shift_ref, o_ref):
    # y * scale + shift ; LeakyReLU(0.2)   (scale/shift fold mean/var/gamma/beta)
    t = y_ref[...] * scale_ref[...] + shift_ref[...]
    o_ref[...] = jnp.maximum(t, 0.2 * t)


# ----------------------------------------------------------------------------
# Glue: padding, im2col, tiling, pallas_call wiring
# ----------------------------------------------------------------------------

def _round_up(x, m):
    return (x + m - 1) // m * m


def _pad2d(x, rows, cols):
    r, c = x.shape
    return jnp.pad(x, ((0, rows - r), (0, cols - c)))


def _m_tiling(m):
    """Pick (TM, Mp): tile rows and padded row count (Mp % TM == 0)."""
    if m <= _TM_MAX:
        tm = _round_up(m, 16)
        return tm, tm
    return _TM_MAX, _round_up(m, _TM_MAX)


def _im2col(x_nhwc, k, stride):
    """x_nhwc already padded. Returns (N*Ho*Wo, k*k*C) patches; column index
    (dy*k + dx)*C + c matches the weight flattening in _conv_layer."""
    N, Hp, Wp, C = x_nhwc.shape
    Ho = (Hp - k) // stride + 1
    Wo = (Wp - k) // stride + 1
    cols = []
    for dy in range(k):
        for dx in range(k):
            cols.append(x_nhwc[:, dy:dy + stride * Ho:stride,
                               dx:dx + stride * Wo:stride, :])  # (N,Ho,Wo,C)
    patches = jnp.stack(cols, axis=3)                            # (N,Ho,Wo,kk,C)
    return patches.reshape(N * Ho * Wo, k * k * C), (N, Ho, Wo)


def _conv_layer(x_nhwc, w_oihw, stride, mode, bias=None, gamma=None, beta=None):
    """One Conv2d(k=4, pad=1) layer with fused epilogue, hot path in Pallas."""
    k = 4
    xp = jnp.pad(x_nhwc, ((0, 0), (1, 1), (1, 1), (0, 0)))
    patches, (N, Ho, Wo) = _im2col(xp, k, stride)
    c_out, c_in = w_oihw.shape[0], w_oihw.shape[1]
    M, K = patches.shape

    Kp = _round_up(K, _LANE)
    Cp = _round_up(c_out, _LANE)
    TM, Mp = _m_tiling(M)
    grid_m = Mp // TM

    # bf16 operands for the MXU (f32 accumulation inside the kernel).
    patches_p = _pad2d(patches, Mp, Kp).astype(jnp.bfloat16)
    # (Cout, Cin, kh, kw) -> (kh, kw, Cin, Cout) -> (kh*kw*Cin, Cout), padded.
    w2 = jnp.transpose(w_oihw, (2, 3, 1, 0)).reshape(K, c_out)
    w_p = _pad2d(w2, Kp, Cp).astype(jnp.bfloat16)

    p_spec = pl.BlockSpec((TM, Kp), lambda i: (i, 0))
    w_spec = pl.BlockSpec((Kp, Cp), lambda i: (0, 0))
    vec_spec = pl.BlockSpec((1, Cp), lambda i: (0, 0))
    y_spec = pl.BlockSpec((TM, Cp), lambda i: (i, 0))

    cparams = pltpu.CompilerParams(
        dimension_semantics=("parallel",),
        vmem_limit_bytes=_VMEM_LIMIT)
    mm_cost = pl.CostEstimate(
        flops=2 * Mp * Kp * Cp,
        transcendentals=0,
        bytes_accessed=Mp * Kp * 2 + Kp * Cp * 2 + Mp * Cp * 4)

    if mode in ("bias_lrelu", "bias_only"):
        b_p = _pad2d(bias.reshape(1, c_out).astype(jnp.float32), 1, Cp)
        kern = _conv_bias_lrelu_kernel if mode == "bias_lrelu" else _conv_bias_kernel
        out = pl.pallas_call(
            kern,
            out_shape=jax.ShapeDtypeStruct((Mp, Cp), jnp.float32),
            grid=(grid_m,),
            in_specs=[p_spec, w_spec, vec_spec],
            out_specs=y_spec,
            compiler_params=cparams,
            cost_estimate=mm_cost,
        )(patches_p, w_p, b_p)

    elif mode == "bn_lrelu":
        # Pass 1: tiled conv matmul + per-tile partial BN statistics.
        y, stats = pl.pallas_call(
            _conv_stats_kernel,
            out_shape=(jax.ShapeDtypeStruct((Mp, Cp), jnp.float32),
                       jax.ShapeDtypeStruct((grid_m * 8, Cp), jnp.float32)),
            grid=(grid_m,),
            in_specs=[p_spec, w_spec],
            out_specs=(y_spec, pl.BlockSpec((8, Cp), lambda i: (i, 0))),
            compiler_params=cparams,
            cost_estimate=mm_cost,
        )(patches_p, w_p)

        # Tiny cross-tile reduction + BN fold (training-mode batch stats over
        # the N*Ho*Wo real rows; biased variance; eps=1e-5).
        stats = stats.reshape(grid_m, 8, Cp)
        ssum = jnp.sum(stats[:, 0, :], axis=0)
        ssq = jnp.sum(stats[:, 1, :], axis=0)
        mean = ssum / M
        var = ssq / M - mean * mean
        inv = jax.lax.rsqrt(var + 1e-5)
        g_p = _pad2d(gamma.reshape(1, c_out).astype(jnp.float32), 1, Cp)
        be_p = _pad2d(beta.reshape(1, c_out).astype(jnp.float32), 1, Cp)
        scale = g_p * inv.reshape(1, Cp)
        shift = be_p - mean.reshape(1, Cp) * scale

        # Pass 2: tiled normalize + LeakyReLU.
        out = pl.pallas_call(
            _bn_lrelu_kernel,
            out_shape=jax.ShapeDtypeStruct((Mp, Cp), jnp.float32),
            grid=(grid_m,),
            in_specs=[y_spec, vec_spec, vec_spec],
            out_specs=y_spec,
            compiler_params=cparams,
            cost_estimate=pl.CostEstimate(
                flops=3 * Mp * Cp, transcendentals=0,
                bytes_accessed=2 * Mp * Cp * 4),
        )(y, scale, shift)
    else:
        raise ValueError(mode)

    return out[:M, :c_out].reshape(N, Ho, Wo, c_out)


# ----------------------------------------------------------------------------
# NLayerDiscriminator parameters + forward
# ----------------------------------------------------------------------------

def init_params(key, input_nc, ndf=64, n_layers=3):
    """Deterministic synthetic parameters mirroring the PyTorch layer shapes."""
    params = []
    keys = iter(jax.random.split(key, 32))

    def w_init(shape):
        return 0.05 * jax.random.normal(next(keys), shape, jnp.float32)

    # Layer 0: Conv(input_nc -> ndf, s=2) + bias, LeakyReLU.
    params.append(dict(w=w_init((ndf, input_nc, 4, 4)),
                       b=w_init((ndf,)), stride=2, mode="bias_lrelu"))
    nf_mult = 1
    for n in range(1, n_layers):
        nf_prev, nf_mult = nf_mult, min(2 ** n, 8)
        params.append(dict(w=w_init((ndf * nf_mult, ndf * nf_prev, 4, 4)),
                           gamma=1.0 + w_init((ndf * nf_mult,)),
                           beta=w_init((ndf * nf_mult,)),
                           stride=2, mode="bn_lrelu"))
    nf_prev, nf_mult = nf_mult, min(2 ** n_layers, 8)
    params.append(dict(w=w_init((ndf * nf_mult, ndf * nf_prev, 4, 4)),
                       gamma=1.0 + w_init((ndf * nf_mult,)),
                       beta=w_init((ndf * nf_mult,)),
                       stride=1, mode="bn_lrelu"))
    # Final: Conv(ndf*nf_mult -> 1, s=1) + bias.
    params.append(dict(w=w_init((1, ndf * nf_mult, 4, 4)),
                       b=w_init((1,)), stride=1, mode="bias_only"))
    return params


def nlayer_discriminator_forward(x_nchw, params):
    x = jnp.transpose(x_nchw, (0, 2, 3, 1))  # NCHW -> NHWC for the kernels
    for p in params:
        x = _conv_layer(
            x, p["w"], p["stride"], p["mode"],
            bias=p.get("b"), gamma=p.get("gamma"), beta=p.get("beta"))
    return jnp.transpose(x, (0, 3, 1, 2))    # NHWC -> NCHW (PyTorch layout)


# ----------------------------------------------------------------------------

if __name__ == "__main__":
    key = jax.random.PRNGKey(0)
    k_x, k_p = jax.random.split(key)

    # Small config: batch=2, input_nc=3, spatial=32 so every conv in the
    # n_layers=3 PatchGAN stack has a valid output.
    batch, input_nc, H, W = 2, 3, 32, 32
    ndf, n_layers = 8, 3

    x = jax.random.normal(k_x, (batch, input_nc, H, W), jnp.float32)
    params = init_params(k_p, input_nc, ndf=ndf, n_layers=n_layers)

    fwd = jax.jit(lambda inp: nlayer_discriminator_forward(inp, params))
    out = jax.block_until_ready(fwd(x))

    # Expected output spatial chain: 32 -> 16 -> 8 -> 4 -> 3 -> 2, channels 1.
    assert out.shape == (batch, 1, 2, 2), out.shape
    assert out.dtype == jnp.float32
    assert bool(jnp.all(jnp.isfinite(out)))

    print("KERNEL_OK")
</pallas_src>

<mosaic_0001>
module attributes {stable_mosaic.version = 11 : i64} {
  func.func @_conv_bias_lrelu_kernel(%arg0: i32, %arg1: memref<512x128xbf16, #tpu.memory_space<vmem>>, %arg2: memref<128x128xbf16, #tpu.memory_space<vmem>>, %arg3: memref<1x128xf32, #tpu.memory_space<vmem>>, %arg4: memref<512x128xf32, #tpu.memory_space<vmem>>) attributes {dimension_semantics = [#tpu.dimension_semantics<parallel>], iteration_bounds = array<i64: 1>, scalar_prefetch = 0 : i64, scratch_operands = 0 : i64, tpu.core_type = #tpu.core_type<tc>, window_params = [{transform_indices = @transform_0, window_bounds = array<i64: 512, 128>}, {pipeline_mode = #tpu.pipeline_mode<synchronous>, transform_indices = @transform_1, window_bounds = array<i64: 128, 128>}, {pipeline_mode = #tpu.pipeline_mode<synchronous>, transform_indices = @transform_2, window_bounds = array<i64: 1, 128>}, {transform_indices = @transform_3, window_bounds = array<i64: 512, 128>}]} {
    %c0 = arith.constant 0 : index
    %c0_0 = arith.constant 0 : index
    %0 = vector.load %arg1[%c0, %c0_0] : memref<512x128xbf16, #tpu.memory_space<vmem>>, vector<512x128xbf16>
    %c0_1 = arith.constant 0 : index
    %c0_2 = arith.constant 0 : index
    %1 = vector.load %arg2[%c0_1, %c0_2] : memref<128x128xbf16, #tpu.memory_space<vmem>>, vector<128x128xbf16>
    %cst = arith.constant dense<0.000000e+00> : vector<512x128xf32>
    %2 = tpu.matmul %0, %1, %cst {dimension_numbers = #tpu.dot_dimension_numbers<[1], [0], [0], [1], [0, 0, 1, 1], [], []>} : vector<512x128xbf16>, vector<128x128xbf16>, vector<512x128xf32> -> vector<512x128xf32>
    %c0_3 = arith.constant 0 : index
    %c0_4 = arith.constant 0 : index
    %3 = vector.load %arg3[%c0_3, %c0_4] : memref<1x128xf32, #tpu.memory_space<vmem>>, vector<1x128xf32>
    %4 = vector.broadcast %3 : vector<1x128xf32> to vector<512x128xf32>
    %5 = arith.addf %2, %4 : vector<512x128xf32>
    %cst_5 = arith.constant 2.000000e-01 : f32
    %6 = vector.broadcast %cst_5 : f32 to vector<512x128xf32>
    %7 = arith.mulf %6, %5 : vector<512x128xf32>
    %8 = arith.maximumf %5, %7 : vector<512x128xf32>
    %c0_6 = arith.constant 0 : index
    %c0_7 = arith.constant 0 : index
    %9 = vector.load %arg4[%c0_6, %c0_7] : memref<512x128xf32, #tpu.memory_space<vmem>>, vector<512x128xf32>
    tpu.vector_store %arg4[%c0_6, %c0_7], %8 {strides = array<i32>} : memref<512x128xf32, #tpu.memory_space<vmem>>, vector<512x128xf32>,
    return
  }
  func.func @transform_0(%arg0: i32) -> (i32, i32) {
    %c0_i32 = arith.constant 0 : i32
    %c0_i32_0 = arith.constant 0 : i32
    return %arg0, %c0_i32 : i32, i32
  }
  func.func @transform_1(%arg0: i32) -> (i32, i32) {
    %c0_i32 = arith.constant 0 : i32
    %c0_i32_0 = arith.constant 0 : i32
    %c0_i32_1 = arith.constant 0 : i32
    return %c0_i32, %c0_i32_0 : i32, i32
  }
  func.func @transform_2(%arg0: i32) -> (i32, i32) {
    %c0_i32 = arith.constant 0 : i32
    %c0_i32_0 = arith.constant 0 : i32
    %c0_i32_1 = arith.constant 0 : i32
    return %c0_i32, %c0_i32_0 : i32, i32
  }
  func.func @transform_3(%arg0: i32) -> (i32, i32) {
    %c0_i32 = arith.constant 0 : i32
    %c0_i32_0 = arith.constant 0 : i32
    return %arg0, %c0_i32 : i32, i32
  }
}

module attributes {stable_mosaic.version = 11 : i64} {
  func.func @_conv_stats_kernel(%arg0: i32, %arg1: memref<128x128xbf16, #tpu.memory_space<vmem>>, %arg2: memref<128x128xbf16, #tpu.memory_space<vmem>>, %arg3: memref<128x128xf32, #tpu.memory_space<vmem>>, %arg4: memref<8x128xf32, #tpu.memory_space<vmem>>) attributes {dimension_semantics = [#tpu.dimension_semantics<parallel>], iteration_bounds = array<i64: 1>, scalar_prefetch = 0 : i64, scratch_operands = 0 : i64, tpu.core_type = #tpu.core_type<tc>, window_params = [{transform_indices = @transform_0, window_bounds = array<i64: 128, 128>}, {pipeline_mode = #tpu.pipeline_mode<synchronous>, transform_indices = @transform_1, window_bounds = array<i64: 128, 128>}, {transform_indices = @transform_2, window_bounds = array<i64: 128, 128>}, {transform_indices = @transform_3, window_bounds = array<i64: 8, 128>}]} {
    %c0 = arith.constant 0 : index
    %c0_0 = arith.constant 0 : index
    %0 = vector.load %arg1[%c0, %c0_0] : memref<128x128xbf16, #tpu.memory_space<vmem>>, vector<128x128xbf16>
    %c0_1 = arith.constant 0 : index
    %c0_2 = arith.constant 0 : index
    %1 = vector.load %arg2[%c0_1, %c0_2] : memref<128x128xbf16, #tpu.memory_space<vmem>>, vector<128x128xbf16>
    %cst = arith.constant dense<0.000000e+00> : vector<128x128xf32>
    %2 = tpu.matmul %0, %1, %cst {dimension_numbers = #tpu.dot_dimension_numbers<[1], [0], [0], [1], [0, 0, 1, 1], [], []>} : vector<128x128xbf16>, vector<128x128xbf16>, vector<128x128xf32> -> vector<128x128xf32>
    %c0_3 = arith.constant 0 : index
    %c0_4 = arith.constant 0 : index
    %3 = vector.load %arg3[%c0_3, %c0_4] : memref<128x128xf32, #tpu.memory_space<vmem>>, vector<128x128xf32>
    tpu.vector_store %arg3[%c0_3, %c0_4], %2 {strides = array<i32>} : memref<128x128xf32, #tpu.memory_space<vmem>>, vector<128x128xf32>,
    %cst_5 = arith.constant dense<0.000000e+00> : vector<128xf32>
    %4 = vector.multi_reduction <add>, %2, %cst_5 [0] : vector<128x128xf32> to vector<128xf32>
    %5 = vector.shape_cast %4 : vector<128xf32> to vector<1x128xf32>
    %6 = arith.mulf %2, %2 : vector<128x128xf32>
    %cst_6 = arith.constant dense<0.000000e+00> : vector<128xf32>
    %7 = vector.multi_reduction <add>, %6, %cst_6 [0] : vector<128x128xf32> to vector<128xf32>
    %8 = vector.shape_cast %7 : vector<128xf32> to vector<1x128xf32>
    %cst_7 = arith.constant 0.000000e+00 : f32
    %9 = vector.broadcast %cst_7 : f32 to vector<6x128xf32>
    %10 = tpu.concatenate %5, %8, %9 in 0 : vector<1x128xf32>, vector<1x128xf32>, vector<6x128xf32> -> vector<8x128xf32>
    %c0_8 = arith.constant 0 : index
    %c0_9 = arith.constant 0 : index
    %11 = vector.load %arg4[%c0_8, %c0_9] : memref<8x128xf32, #tpu.memory_space<vmem>>, vector<8x128xf32>
    tpu.vector_store %arg4[%c0_8, %c0_9], %10 {strides = array<i32>} : memref<8x128xf32, #tpu.memory_space<vmem>>, vector<8x128xf32>,
    return
  }
  func.func @transform_0(%arg0: i32) -> (i32, i32) {
    %c0_i32 = arith.constant 0 : i32
    %c0_i32_0 = arith.constant 0 : i32
    return %arg0, %c0_i32 : i32, i32
  }
  func.func @transform_1(%arg0: i32) -> (i32, i32) {
    %c0_i32 = arith.constant 0 : i32
    %c0_i32_0 = arith.constant 0 : i32
    %c0_i32_1 = arith.constant 0 : i32
    return %c0_i32, %c0_i32_0 : i32, i32
  }
  func.func @transform_2(%arg0: i32) -> (i32, i32) {
    %c0_i32 = arith.constant 0 : i32
    %c0_i32_0 = arith.constant 0 : i32
    return %arg0, %c0_i32 : i32, i32
  }
  func.func @transform_3(%arg0: i32) -> (i32, i32) {
    %c0_i32 = arith.constant 0 : i32
    %c0_i32_0 = arith.constant 0 : i32
    return %arg0, %c0_i32 : i32, i32
  }
}

module attributes {stable_mosaic.version = 11 : i64} {
  func.func @_bn_lrelu_kernel(%arg0: i32, %arg1: memref<128x128xf32, #tpu.memory_space<vmem>>, %arg2: memref<1x128xf32, #tpu.memory_space<vmem>>, %arg3: memref<1x128xf32, #tpu.memory_space<vmem>>, %arg4: memref<128x128xf32, #tpu.memory_space<vmem>>) attributes {dimension_semantics = [#tpu.dimension_semantics<parallel>], iteration_bounds = array<i64: 1>, scalar_prefetch = 0 : i64, scratch_operands = 0 : i64, tpu.core_type = #tpu.core_type<tc>, window_params = [{transform_indices = @transform_0, window_bounds = array<i64: 128, 128>}, {pipeline_mode = #tpu.pipeline_mode<synchronous>, transform_indices = @transform_1, window_bounds = array<i64: 1, 128>}, {pipeline_mode = #tpu.pipeline_mode<synchronous>, transform_indices = @transform_2, window_bounds = array<i64: 1, 128>}, {transform_indices = @transform_3, window_bounds = array<i64: 128, 128>}]} {
    %c0 = arith.constant 0 : index
    %c0_0 = arith.constant 0 : index
    %0 = vector.load %arg1[%c0, %c0_0] : memref<128x128xf32, #tpu.memory_space<vmem>>, vector<128x128xf32>
    %c0_1 = arith.constant 0 : index
    %c0_2 = arith.constant 0 : index
    %1 = vector.load %arg2[%c0_1, %c0_2] : memref<1x128xf32, #tpu.memory_space<vmem>>, vector<1x128xf32>
    %2 = vector.broadcast %1 : vector<1x128xf32> to vector<128x128xf32>
    %3 = arith.mulf %0, %2 : vector<128x128xf32>
    %c0_3 = arith.constant 0 : index
    %c0_4 = arith.constant 0 : index
    %4 = vector.load %arg3[%c0_3, %c0_4] : memref<1x128xf32, #tpu.memory_space<vmem>>, vector<1x128xf32>
    %5 = vector.broadcast %4 : vector<1x128xf32> to vector<128x128xf32>
    %6 = arith.addf %3, %5 : vector<128x128xf32>
    %cst = arith.constant 2.000000e-01 : f32
    %7 = vector.broadcast %cst : f32 to vector<128x128xf32>
    %8 = arith.mulf %7, %6 : vector<128x128xf32>
    %9 = arith.maximumf %6, %8 : vector<128x128xf32>
    %c0_5 = arith.constant 0 : index
    %c0_6 = arith.constant 0 : index
    %10 = vector.load %arg4[%c0_5, %c0_6] : memref<128x128xf32, #tpu.memory_space<vmem>>, vector<128x128xf32>
    tpu.vector_store %arg4[%c0_5, %c0_6], %9 {strides = array<i32>} : memref<128x128xf32, #tpu.memory_space<vmem>>, vector<128x128xf32>,
    return
  }
  func.func @transform_0(%arg0: i32) -> (i32, i32) {
    %c0_i32 = arith.constant 0 : i32
    %c0_i32_0 = arith.constant 0 : i32
    return %arg0, %c0_i32 : i32, i32
  }
  func.func @transform_1(%arg0: i32) -> (i32, i32) {
    %c0_i32 = arith.constant 0 : i32
    %c0_i32_0 = arith.constant 0 : i32
    %c0_i32_1 = arith.constant 0 : i32
    return %c0_i32, %c0_i32_0 : i32, i32
  }
  func.func @transform_2(%arg0: i32) -> (i32, i32) {
    %c0_i32 = arith.constant 0 : i32
    %c0_i32_0 = arith.constant 0 : i32
    %c0_i32_1 = arith.constant 0 : i32
    return %c0_i32, %c0_i32_0 : i32, i32
  }
  func.func @transform_3(%arg0: i32) -> (i32, i32) {
    %c0_i32 = arith.constant 0 : i32
    %c0_i32_0 = arith.constant 0 : i32
    return %arg0, %c0_i32 : i32, i32
  }
}

module attributes {stable_mosaic.version = 11 : i64} {
  func.func @_conv_stats_kernel(%arg0: i32, %arg1: memref<32x256xbf16, #tpu.memory_space<vmem>>, %arg2: memref<256x128xbf16, #tpu.memory_space<vmem>>, %arg3: memref<32x128xf32, #tpu.memory_space<vmem>>, %arg4: memref<8x128xf32, #tpu.memory_space<vmem>>) attributes {dimension_semantics = [#tpu.dimension_semantics<parallel>], iteration_bounds = array<i64: 1>, scalar_prefetch = 0 : i64, scratch_operands = 0 : i64, tpu.core_type = #tpu.core_type<tc>, window_params = [{transform_indices = @transform_0, window_bounds = array<i64: 32, 256>}, {pipeline_mode = #tpu.pipeline_mode<synchronous>, transform_indices = @transform_1, window_bounds = array<i64: 256, 128>}, {transform_indices = @transform_2, window_bounds = array<i64: 32, 128>}, {transform_indices = @transform_3, window_bounds = array<i64: 8, 128>}]} {
    %c0 = arith.constant 0 : index
    %c0_0 = arith.constant 0 : index
    %0 = vector.load %arg1[%c0, %c0_0] : memref<32x256xbf16, #tpu.memory_space<vmem>>, vector<32x256xbf16>
    %c0_1 = arith.constant 0 : index
    %c0_2 = arith.constant 0 : index
    %1 = vector.load %arg2[%c0_1, %c0_2] : memref<256x128xbf16, #tpu.memory_space<vmem>>, vector<256x128xbf16>
    %cst = arith.constant dense<0.000000e+00> : vector<32x128xf32>
    %2 = tpu.matmul %0, %1, %cst {dimension_numbers = #tpu.dot_dimension_numbers<[1], [0], [0], [1], [0, 0, 1, 1], [], []>} : vector<32x256xbf16>, vector<256x128xbf16>, vector<32x128xf32> -> vector<32x128xf32>
    %c0_3 = arith.constant 0 : index
    %c0_4 = arith.constant 0 : index
    %3 = vector.load %arg3[%c0_3, %c0_4] : memref<32x128xf32, #tpu.memory_space<vmem>>, vector<32x128xf32>
    tpu.vector_store %arg3[%c0_3, %c0_4], %2 {strides = array<i32>} : memref<32x128xf32, #tpu.memory_space<vmem>>, vector<32x128xf32>,
    %cst_5 = arith.constant dense<0.000000e+00> : vector<128xf32>
    %4 = vector.multi_reduction <add>, %2, %cst_5 [0] : vector<32x128xf32> to vector<128xf32>
    %5 = vector.shape_cast %4 : vector<128xf32> to vector<1x128xf32>
    %6 = arith.mulf %2, %2 : vector<32x128xf32>
    %cst_6 = arith.constant dense<0.000000e+00> : vector<128xf32>
    %7 = vector.multi_reduction <add>, %6, %cst_6 [0] : vector<32x128xf32> to vector<128xf32>
    %8 = vector.shape_cast %7 : vector<128xf32> to vector<1x128xf32>
    %cst_7 = arith.constant 0.000000e+00 : f32
    %9 = vector.broadcast %cst_7 : f32 to vector<6x128xf32>
    %10 = tpu.concatenate %5, %8, %9 in 0 : vector<1x128xf32>, vector<1x128xf32>, vector<6x128xf32> -> vector<8x128xf32>
    %c0_8 = arith.constant 0 : index
    %c0_9 = arith.constant 0 : index
    %11 = vector.load %arg4[%c0_8, %c0_9] : memref<8x128xf32, #tpu.memory_space<vmem>>, vector<8x128xf32>
    tpu.vector_store %arg4[%c0_8, %c0_9], %10 {strides = array<i32>} : memref<8x128xf32, #tpu.memory_space<vmem>>, vector<8x128xf32>,
    return
  }
  func.func @transform_0(%arg0: i32) -> (i32, i32) {
    %c0_i32 = arith.constant 0 : i32
    %c0_i32_0 = arith.constant 0 : i32
    return %arg0, %c0_i32 : i32, i32
  }
  func.func @transform_1(%arg0: i32) -> (i32, i32) {
    %c0_i32 = arith.constant 0 : i32
    %c0_i32_0 = arith.constant 0 : i32
    %c0_i32_1 = arith.constant 0 : i32
    return %c0_i32, %c0_i32_0 : i32, i32
  }
  func.func @transform_2(%arg0: i32) -> (i32, i32) {
    %c0_i32 = arith.constant 0 : i32
    %c0_i32_0 = arith.constant 0 : i32
    return %arg0, %c0_i32 : i32, i32
  }
  func.func @transform_3(%arg0: i32) -> (i32, i32) {
    %c0_i32 = arith.constant 0 : i32
    %c0_i32_0 = arith.constant 0 : i32
    return %arg0, %c0_i32 : i32, i32
  }
}

module attributes {stable_mosaic.version = 11 : i64} {
  func.func @_bn_lrelu_kernel(%arg0: i32, %arg1: memref<32x128xf32, #tpu.memory_space<vmem>>, %arg2: memref<1x128xf32, #tpu.memory_space<vmem>>, %arg3: memref<1x128xf32, #tpu.memory_space<vmem>>, %arg4: memref<32x128xf32, #tpu.memory_space<vmem>>) attributes {dimension_semantics = [#tpu.dimension_semantics<parallel>], iteration_bounds = array<i64: 1>, scalar_prefetch = 0 : i64, scratch_operands = 0 : i64, tpu.core_type = #tpu.core_type<tc>, window_params = [{transform_indices = @transform_0, window_bounds = array<i64: 32, 128>}, {pipeline_mode = #tpu.pipeline_mode<synchronous>, transform_indices = @transform_1, window_bounds = array<i64: 1, 128>}, {pipeline_mode = #tpu.pipeline_mode<synchronous>, transform_indices = @transform_2, window_bounds = array<i64: 1, 128>}, {transform_indices = @transform_3, window_bounds = array<i64: 32, 128>}]} {
    %c0 = arith.constant 0 : index
    %c0_0 = arith.constant 0 : index
    %0 = vector.load %arg1[%c0, %c0_0] : memref<32x128xf32, #tpu.memory_space<vmem>>, vector<32x128xf32>
    %c0_1 = arith.constant 0 : index
    %c0_2 = arith.constant 0 : index
    %1 = vector.load %arg2[%c0_1, %c0_2] : memref<1x128xf32, #tpu.memory_space<vmem>>, vector<1x128xf32>
    %2 = vector.broadcast %1 : vector<1x128xf32> to vector<32x128xf32>
    %3 = arith.mulf %0, %2 : vector<32x128xf32>
    %c0_3 = arith.constant 0 : index
    %c0_4 = arith.constant 0 : index
    %4 = vector.load %arg3[%c0_3, %c0_4] : memref<1x128xf32, #tpu.memory_space<vmem>>, vector<1x128xf32>
    %5 = vector.broadcast %4 : vector<1x128xf32> to vector<32x128xf32>
    %6 = arith.addf %3, %5 : vector<32x128xf32>
    %cst = arith.constant 2.000000e-01 : f32
    %7 = vector.broadcast %cst : f32 to vector<32x128xf32>
    %8 = arith.mulf %7, %6 : vector<32x128xf32>
    %9 = arith.maximumf %6, %8 : vector<32x128xf32>
    %c0_5 = arith.constant 0 : index
    %c0_6 = arith.constant 0 : index
    %10 = vector.load %arg4[%c0_5, %c0_6] : memref<32x128xf32, #tpu.memory_space<vmem>>, vector<32x128xf32>
    tpu.vector_store %arg4[%c0_5, %c0_6], %9 {strides = array<i32>} : memref<32x128xf32, #tpu.memory_space<vmem>>, vector<32x128xf32>,
    return
  }
  func.func @transform_0(%arg0: i32) -> (i32, i32) {
    %c0_i32 = arith.constant 0 : i32
    %c0_i32_0 = arith.constant 0 : i32
    return %arg0, %c0_i32 : i32, i32
  }
  func.func @transform_1(%arg0: i32) -> (i32, i32) {
    %c0_i32 = arith.constant 0 : i32
    %c0_i32_0 = arith.constant 0 : i32
    %c0_i32_1 = arith.constant 0 : i32
    return %c0_i32, %c0_i32_0 : i32, i32
  }
  func.func @transform_2(%arg0: i32) -> (i32, i32) {
    %c0_i32 = arith.constant 0 : i32
    %c0_i32_0 = arith.constant 0 : i32
    %c0_i32_1 = arith.constant 0 : i32
    return %c0_i32, %c0_i32_0 : i32, i32
  }
  func.func @transform_3(%arg0: i32) -> (i32, i32) {
    %c0_i32 = arith.constant 0 : i32
    %c0_i32_0 = arith.constant 0 : i32
    return %arg0, %c0_i32 : i32, i32
  }
}

module attributes {stable_mosaic.version = 11 : i64} {
  func.func @_conv_stats_kernel(%arg0: i32, %arg1: memref<32x512xbf16, #tpu.memory_space<vmem>>, %arg2: memref<512x128xbf16, #tpu.memory_space<vmem>>, %arg3: memref<32x128xf32, #tpu.memory_space<vmem>>, %arg4: memref<8x128xf32, #tpu.memory_space<vmem>>) attributes {dimension_semantics = [#tpu.dimension_semantics<parallel>], iteration_bounds = array<i64: 1>, scalar_prefetch = 0 : i64, scratch_operands = 0 : i64, tpu.core_type = #tpu.core_type<tc>, window_params = [{transform_indices = @transform_0, window_bounds = array<i64: 32, 512>}, {pipeline_mode = #tpu.pipeline_mode<synchronous>, transform_indices = @transform_1, window_bounds = array<i64: 512, 128>}, {transform_indices = @transform_2, window_bounds = array<i64: 32, 128>}, {transform_indices = @transform_3, window_bounds = array<i64: 8, 128>}]} {
    %c0 = arith.constant 0 : index
    %c0_0 = arith.constant 0 : index
    %0 = vector.load %arg1[%c0, %c0_0] : memref<32x512xbf16, #tpu.memory_space<vmem>>, vector<32x512xbf16>
    %c0_1 = arith.constant 0 : index
    %c0_2 = arith.constant 0 : index
    %1 = vector.load %arg2[%c0_1, %c0_2] : memref<512x128xbf16, #tpu.memory_space<vmem>>, vector<512x128xbf16>
    %cst = arith.constant dense<0.000000e+00> : vector<32x128xf32>
    %2 = tpu.matmul %0, %1, %cst {dimension_numbers = #tpu.dot_dimension_numbers<[1], [0], [0], [1], [0, 0, 1, 1], [], []>} : vector<32x512xbf16>, vector<512x128xbf16>, vector<32x128xf32> -> vector<32x128xf32>
    %c0_3 = arith.constant 0 : index
    %c0_4 = arith.constant 0 : index
    %3 = vector.load %arg3[%c0_3, %c0_4] : memref<32x128xf32, #tpu.memory_space<vmem>>, vector<32x128xf32>
    tpu.vector_store %arg3[%c0_3, %c0_4], %2 {strides = array<i32>} : memref<32x128xf32, #tpu.memory_space<vmem>>, vector<32x128xf32>,
    %cst_5 = arith.constant dense<0.000000e+00> : vector<128xf32>
    %4 = vector.multi_reduction <add>, %2, %cst_5 [0] : vector<32x128xf32> to vector<128xf32>
    %5 = vector.shape_cast %4 : vector<128xf32> to vector<1x128xf32>
    %6 = arith.mulf %2, %2 : vector<32x128xf32>
    %cst_6 = arith.constant dense<0.000000e+00> : vector<128xf32>
    %7 = vector.multi_reduction <add>, %6, %cst_6 [0] : vector<32x128xf32> to vector<128xf32>
    %8 = vector.shape_cast %7 : vector<128xf32> to vector<1x128xf32>
    %cst_7 = arith.constant 0.000000e+00 : f32
    %9 = vector.broadcast %cst_7 : f32 to vector<6x128xf32>
    %10 = tpu.concatenate %5, %8, %9 in 0 : vector<1x128xf32>, vector<1x128xf32>, vector<6x128xf32> -> vector<8x128xf32>
    %c0_8 = arith.constant 0 : index
    %c0_9 = arith.constant 0 : index
    %11 = vector.load %arg4[%c0_8, %c0_9] : memref<8x128xf32, #tpu.memory_space<vmem>>, vector<8x128xf32>
    tpu.vector_store %arg4[%c0_8, %c0_9], %10 {strides = array<i32>} : memref<8x128xf32, #tpu.memory_space<vmem>>, vector<8x128xf32>,
    return
  }
  func.func @transform_0(%arg0: i32) -> (i32, i32) {
    %c0_i32 = arith.constant 0 : i32
    %c0_i32_0 = arith.constant 0 : i32
    return %arg0, %c0_i32 : i32, i32
  }
  func.func @transform_1(%arg0: i32) -> (i32, i32) {
    %c0_i32 = arith.constant 0 : i32
    %c0_i32_0 = arith.constant 0 : i32
    %c0_i32_1 = arith.constant 0 : i32
    return %c0_i32, %c0_i32_0 : i32, i32
  }
  func.func @transform_2(%arg0: i32) -> (i32, i32) {
    %c0_i32 = arith.constant 0 : i32
    %c0_i32_0 = arith.constant 0 : i32
    return %arg0, %c0_i32 : i32, i32
  }
  func.func @transform_3(%arg0: i32) -> (i32, i32) {
    %c0_i32 = arith.constant 0 : i32
    %c0_i32_0 = arith.constant 0 : i32
    return %arg0, %c0_i32 : i32, i32
  }
}

module attributes {stable_mosaic.version = 11 : i64} {
  func.func @_conv_bias_kernel(%arg0: i32, %arg1: memref<16x1024xbf16, #tpu.memory_space<vmem>>, %arg2: memref<1024x128xbf16, #tpu.memory_space<vmem>>, %arg3: memref<1x128xf32, #tpu.memory_space<vmem>>, %arg4: memref<16x128xf32, #tpu.memory_space<vmem>>) attributes {dimension_semantics = [#tpu.dimension_semantics<parallel>], iteration_bounds = array<i64: 1>, scalar_prefetch = 0 : i64, scratch_operands = 0 : i64, tpu.core_type = #tpu.core_type<tc>, window_params = [{transform_indices = @transform_0, window_bounds = array<i64: 16, 1024>}, {pipeline_mode = #tpu.pipeline_mode<synchronous>, transform_indices = @transform_1, window_bounds = array<i64: 1024, 128>}, {pipeline_mode = #tpu.pipeline_mode<synchronous>, transform_indices = @transform_2, window_bounds = array<i64: 1, 128>}, {transform_indices = @transform_3, window_bounds = array<i64: 16, 128>}]} {
    %c0 = arith.constant 0 : index
    %c0_0 = arith.constant 0 : index
    %0 = vector.load %arg1[%c0, %c0_0] : memref<16x1024xbf16, #tpu.memory_space<vmem>>, vector<16x1024xbf16>
    %c0_1 = arith.constant 0 : index
    %c0_2 = arith.constant 0 : index
    %1 = vector.load %arg2[%c0_1, %c0_2] : memref<1024x128xbf16, #tpu.memory_space<vmem>>, vector<1024x128xbf16>
    %cst = arith.constant dense<0.000000e+00> : vector<16x128xf32>
    %2 = tpu.matmul %0, %1, %cst {dimension_numbers = #tpu.dot_dimension_numbers<[1], [0], [0], [1], [0, 0, 1, 1], [], []>} : vector<16x1024xbf16>, vector<1024x128xbf16>, vector<16x128xf32> -> vector<16x128xf32>
    %c0_3 = arith.constant 0 : index
    %c0_4 = arith.constant 0 : index
    %3 = vector.load %arg3[%c0_3, %c0_4] : memref<1x128xf32, #tpu.memory_space<vmem>>, vector<1x128xf32>
    %4 = vector.broadcast %3 : vector<1x128xf32> to vector<16x128xf32>
    %5 = arith.addf %2, %4 : vector<16x128xf32>
    %c0_5 = arith.constant 0 : index
    %c0_6 = arith.constant 0 : index
    %6 = vector.load %arg4[%c0_5, %c0_6] : memref<16x128xf32, #tpu.memory_space<vmem>>, vector<16x128xf32>
    tpu.vector_store %arg4[%c0_5, %c0_6], %5 {strides = array<i32>} : memref<16x128xf32, #tpu.memory_space<vmem>>, vector<16x128xf32>,
    return
  }
  func.func @transform_0(%arg0: i32) -> (i32, i32) {
    %c0_i32 = arith.constant 0 : i32
    %c0_i32_0 = arith.constant 0 : i32
    return %arg0, %c0_i32 : i32, i32
  }
  func.func @transform_1(%arg0: i32) -> (i32, i32) {
    %c0_i32 = arith.constant 0 : i32
    %c0_i32_0 = arith.constant 0 : i32
    %c0_i32_1 = arith.constant 0 : i32
    return %c0_i32, %c0_i32_0 : i32, i32
  }
  func.func @transform_2(%arg0: i32) -> (i32, i32) {
    %c0_i32 = arith.constant 0 : i32
    %c0_i32_0 = arith.constant 0 : i32
    %c0_i32_1 = arith.constant 0 : i32
    return %c0_i32, %c0_i32_0 : i32, i32
  }
  func.func @transform_3(%arg0: i32) -> (i32, i32) {
    %c0_i32 = arith.constant 0 : i32
    %c0_i32_0 = arith.constant 0 : i32
    return %arg0, %c0_i32 : i32, i32
  }
}

</mosaic_0001>

<llo_original>
// kernel: _lambda_.8
$region0: #{_lambda_.8}
  #allocation0 [shape = 'u32[]', space=smem, size = 0x4, offset = 0x4, fixed_abs, tag = 'smem constant byte address 0x4 - core index']
  #allocation1 [shape = 'u32[144,128]{1,0:T(1,128)}', space=vmem, size = 0x12000, scoped, tag = 'internal scratch']
  %s0 = inlined_call_operand.vmem [shape: bf16[512,128], index: 0, kind: input, shape index: {}]
  %s1 = inlined_call_operand.vmem [shape: bf16[128,128], index: 1, kind: input, shape index: {}]
  %s2 = inlined_call_operand.vmem [shape: f32[1,128], index: 2, kind: input, shape index: {}]
  %s3 = inlined_call_operand.vmem [shape: f32[512,128], index: 3, kind: output, shape index: {}]
  %s4 = sld [smem:[#allocation0]]
  $region22: #{_lambda_.8} parent=0
    _
  %s6 = ssub.s32 1, %s4
  %s7 = scalar_select 0, %s6, %s4
  // Predicated region
  $region2: #{_lambda_.8} parent=0 // pred_check
    _
  $region3: #{_lambda_.8} parent=0 // pred_check_branch
    %9 = sbr.rel (0) target = $region5
  $region4: #{_lambda_.8} parent=0 // pred_region
    _
  $region5: #{_lambda_.8} parent=0 // pred_fallthru
    _
  // Predicated region
  $region6: #{_lambda_.8} parent=0 // pred_check
    _
  $region7: #{_lambda_.8} parent=0 // pred_check_branch
    %11 = sbr.rel (0) target = $region9
  $region8: #{_lambda_.8} parent=0 // pred_region
    _
  $region9: #{_lambda_.8} parent=0 // pred_fallthru
    _
  // Predicated region
  $region10: #{_lambda_.8} parent=0 // pred_check
    _
  $region11: #{_lambda_.8} parent=0 // pred_check_branch
    %13 = sbr.rel (0) target = $region13
  $region12: #{_lambda_.8} parent=0 // pred_region
    _
  $region13: #{_lambda_.8} parent=0 // pred_fallthru
    _
  %v15 = vld [vmem:[%s0] sm:$0xf]
  %v16 = vld [vmem:[%s0 + $0x4] sm:$0xf]
  %v17 = vld [vmem:[%s0 + $0x8] sm:$0xf]
  %v18 = vld [vmem:[%s0 + $0xc] sm:$0xf]
  %v19 = vld [vmem:[%s0 + $0x10] sm:$0xf]
  %v20 = vld [vmem:[%s0 + $0x14] sm:$0xf]
  %v21 = vld [vmem:[%s0 + $0x18] sm:$0xf]
  %v22 = vld [vmem:[%s0 + $0x1c] sm:$0xf]
  %v23 = vld [vmem:[%s0 + $0x20] sm:$0xf]
  %v24 = vld [vmem:[%s0 + $0x24] sm:$0xf]
  %v25 = vld [vmem:[%s0 + $0x28] sm:$0xf]
  %v26 = vld [vmem:[%s0 + $0x2c] sm:$0xf]
  %v27 = vld [vmem:[%s0 + $0x30] sm:$0xf]
  %v28 = vld [vmem:[%s0 + $0x34] sm:$0xf]
  %v29 = vld [vmem:[%s0 + $0x38] sm:$0xf]
  %v30 = vld [vmem:[%s0 + $0x3c] sm:$0xf]
  %v31 = vld [vmem:[%s0 + $0x40] sm:$0xf]
  %v32 = vld [vmem:[%s0 + $0x44] sm:$0xf]
  %v33 = vld [vmem:[%s0 + $0x48] sm:$0xf]
  %v34 = vld [vmem:[%s0 + $0x4c] sm:$0xf]
  %v35 = vld [vmem:[%s0 + $0x50] sm:$0xf]
  %v36 = vld [vmem:[%s0 + $0x54] sm:$0xf]
  %v37 = vld [vmem:[%s0 + $0x58] sm:$0xf]
  %v38 = vld [vmem:[%s0 + $0x5c] sm:$0xf]
  %v39 = vld [vmem:[%s0 + $0x60] sm:$0xf]
  %v40 = vld [vmem:[%s0 + $0x64] sm:$0xf]
  %v41 = vld [vmem:[%s0 + $0x68] sm:$0xf]
  %v42 = vld [vmem:[%s0 + $0x6c] sm:$0xf]
  %v43 = vld [vmem:[%s0 + $0x70] sm:$0xf]
  %v44 = vld [vmem:[%s0 + $0x74] sm:$0xf]
  %v45 = vld [vmem:[%s0 + $0x78] sm:$0xf]
  %v46 = vld [vmem:[%s0 + $0x7c] sm:$0xf]
  %v47 = vld [vmem:[%s0 + $0x80] sm:$0xf]
  %v48 = vld [vmem:[%s0 + $0x84] sm:$0xf]
  %v49 = vld [vmem:[%s0 + $0x88] sm:$0xf]
  %v50 = vld [vmem:[%s0 + $0x8c] sm:$0xf]
  %v51 = vld [vmem:[%s0 + $0x90] sm:$0xf]
  %v52 = vld [vmem:[%s0 + $0x94] sm:$0xf]
  %v53 = vld [vmem:[%s0 + $0x98] sm:$0xf]
  %v54 = vld [vmem:[%s0 + $0x9c] sm:$0xf]
  %v55 = vld [vmem:[%s0 + $0xa0] sm:$0xf]
  %v56 = vld [vmem:[%s0 + $0xa4] sm:$0xf]
  %v57 = vld [vmem:[%s0 + $0xa8] sm:$0xf]
  %v58 = vld [vmem:[%s0 + $0xac] sm:$0xf]
  %v59 = vld [vmem:[%s0 + $0xb0] sm:$0xf]
  %v60 = vld [vmem:[%s0 + $0xb4] sm:$0xf]
  %v61 = vld [vmem:[%s0 + $0xb8] sm:$0xf]
  %v62 = vld [vmem:[%s0 + $0xbc] sm:$0xf]
  %v63 = vld [vmem:[%s0 + $0xc0] sm:$0xf]
  %v64 = vld [vmem:[%s0 + $0xc4] sm:$0xf]
  %v65 = vld [vmem:[%s0 + $0xc8] sm:$0xf]
  %v66 = vld [vmem:[%s0 + $0xcc] sm:$0xf]
  %v67 = vld [vmem:[%s0 + $0xd0] sm:$0xf]
  %v68 = vld [vmem:[%s0 + $0xd4] sm:$0xf]
  %v69 = vld [vmem:[%s0 + $0xd8] sm:$0xf]
  %v70 = vld [vmem:[%s0 + $0xdc] sm:$0xf]
  %v71 = vld [vmem:[%s0 + $0xe0] sm:$0xf]
  %v72 = vld [vmem:[%s0 + $0xe4] sm:$0xf]
  %v73 = vld [vmem:[%s0 + $0xe8] sm:$0xf]
  %v74 = vld [vmem:[%s0 + $0xec] sm:$0xf]
  %v75 = vld [vmem:[%s0 + $0xf0] sm:$0xf]
  %v76 = vld [vmem:[%s0 + $0xf4] sm:$0xf]
  %v77 = vld [vmem:[%s0 + $0xf8] sm:$0xf]
  %v78 = vld [vmem:[%s0 + $0xfc] sm:$0xf]
  %v79 = vld [vmem:[%s1] sm:$0xf]
  %v80 = vld [vmem:[%s1 + $0x4] sm:$0xf]
  %v81 = vld [vmem:[%s1 + $0x8] sm:$0xf]
  %v82 = vld [vmem:[%s1 + $0xc] sm:$0xf]
  %v83 = vld [vmem:[%s1 + $0x10] sm:$0xf]
  %v84 = vld [vmem:[%s1 + $0x14] sm:$0xf]
  %v85 = vld [vmem:[%s1 + $0x18] sm:$0xf]
  %v86 = vld [vmem:[%s1 + $0x1c] sm:$0xf]
  %v87 = vld [vmem:[%s1 + $0x20] sm:$0xf]
  %v88 = vld [vmem:[%s1 + $0x24] sm:$0xf]
  %v89 = vld [vmem:[%s1 + $0x28] sm:$0xf]
  %v90 = vld [vmem:[%s1 + $0x2c] sm:$0xf]
  %v91 = vld [vmem:[%s1 + $0x30] sm:$0xf]
  %v92 = vld [vmem:[%s1 + $0x34] sm:$0xf]
  %v93 = vld [vmem:[%s1 + $0x38] sm:$0xf]
  %v94 = vld [vmem:[%s1 + $0x3c] sm:$0xf]
  %v95 = vld [vmem:[%s2] sm:$0x1]
  %v97 = vlaneseq
  %v98 = vshrl.u32 %v97, 7
  %v99 = vsub.s32 0, %v98
  %v100 = vrot.slane %v95, %v99
  %v166 = vunpack.c.l.b16 %v15
  %v167 = vunpack.c.l.b16 %v16
  %v168 = vunpack.c.l.b16 %v17
  %v169 = vunpack.c.l.b16 %v18
  %v170 = vunpack.c.l.b16 %v19
  %v171 = vunpack.c.l.b16 %v20
  %v172 = vunpack.c.l.b16 %v21
  %v173 = vunpack.c.l.b16 %v22
  %v174 = vunpack.c.l.b16 %v23
  %v175 = vunpack.c.l.b16 %v24
  %v176 = vunpack.c.l.b16 %v25
  %v177 = vunpack.c.l.b16 %v26
  %v178 = vunpack.c.l.b16 %v27
  %v179 = vunpack.c.l.b16 %v28
  %v180 = vunpack.c.l.b16 %v29
  %v181 = vunpack.c.l.b16 %v30
  %v182 = vunpack.c.l.b16 %v31
  %v183 = vunpack.c.l.b16 %v32
  %v184 = vunpack.c.l.b16 %v33
  %v185 = vunpack.c.l.b16 %v34
  %v186 = vunpack.c.l.b16 %v35
  %v187 = vunpack.c.l.b16 %v36
  %v188 = vunpack.c.l.b16 %v37
  %v189 = vunpack.c.l.b16 %v38
  %v190 = vunpack.c.l.b16 %v39
  %v191 = vunpack.c.l.b16 %v40
  %v192 = vunpack.c.l.b16 %v41
  %v193 = vunpack.c.l.b16 %v42
  %v194 = vunpack.c.l.b16 %v43
  %v195 = vunpack.c.l.b16 %v44
  %v196 = vunpack.c.l.b16 %v45
  %v197 = vunpack.c.l.b16 %v46
  %v198 = vunpack.c.l.b16 %v47
  %v199 = vunpack.c.l.b16 %v48
  %v200 = vunpack.c.l.b16 %v49
  %v201 = vunpack.c.l.b16 %v50
  %v202 = vunpack.c.l.b16 %v51
  %v203 = vunpack.c.l.b16 %v52
  %v204 = vunpack.c.l.b16 %v53
  %v205 = vunpack.c.l.b16 %v54
  %v206 = vunpack.c.l.b16 %v55
  %v207 = vunpack.c.l.b16 %v56
  %v208 = vunpack.c.l.b16 %v57
  %v209 = vunpack.c.l.b16 %v58
  %v210 = vunpack.c.l.b16 %v59
  %v211 = vunpack.c.l.b16 %v60
  %v212 = vunpack.c.l.b16 %v61
  %v213 = vunpack.c.l.b16 %v62
  %v214 = vunpack.c.l.b16 %v63
  %v215 = vunpack.c.l.b16 %v64
  %v216 = vunpack.c.l.b16 %v65
  %v217 = vunpack.c.l.b16 %v66
  %v218 = vunpack.c.l.b16 %v67
  %v219 = vunpack.c.l.b16 %v68
  %v220 = vunpack.c.l.b16 %v69
  %v221 = vunpack.c.l.b16 %v70
  %v222 = vunpack.c.l.b16 %v71
  %v223 = vunpack.c.l.b16 %v72
  %v224 = vunpack.c.l.b16 %v73
  %v225 = vunpack.c.l.b16 %v74
  %v226 = vunpack.c.l.b16 %v75
  %v227 = vunpack.c.l.b16 %v76
  %v228 = vunpack.c.l.b16 %v77
  %v229 = vunpack.c.l.b16 %v78
  %v230 = vpack.c.b16 %v167, %v166
  %v231 = vpack.c.b16 %v169, %v168
  %v232 = vpack.c.b16 %v171, %v170
  %v233 = vpack.c.b16 %v173, %v172
  %v234 = vpack.c.b16 %v175, %v174
  %v235 = vpack.c.b16 %v177, %v176
  %v236 = vpack.c.b16 %v179, %v178
  %v237 = vpack.c.b16 %v181, %v180
  %v238 = vpack.c.b16 %v183, %v182
  %v239 = vpack.c.b16 %v185, %v184
  %v240 = vpack.c.b16 %v187, %v186
  %v241 = vpack.c.b16 %v189, %v188
  %v242 = vpack.c.b16 %v191, %v190
  %v243 = vpack.c.b16 %v193, %v192
  %v244 = vpack.c.b16 %v195, %v194
  %v245 = vpack.c.b16 %v197, %v196
  %v246 = vpack.c.b16 %v199, %v198
  %v247 = vpack.c.b16 %v201, %v200
  %v248 = vpack.c.b16 %v203, %v202
  %v249 = vpack.c.b16 %v205, %v204
  %v250 = vpack.c.b16 %v207, %v206
  %v251 = vpack.c.b16 %v209, %v208
  %v252 = vpack.c.b16 %v211, %v210
  %v253 = vpack.c.b16 %v213, %v212
  %v254 = vpack.c.b16 %v215, %v214
  %v255 = vpack.c.b16 %v217, %v216
  %v256 = vpack.c.b16 %v219, %v218
  %v257 = vpack.c.b16 %v221, %v220
  %v258 = vpack.c.b16 %v223, %v222
  %v259 = vpack.c.b16 %v225, %v224
  %v260 = vpack.c.b16 %v227, %v226
  %v261 = vpack.c.b16 %v229, %v228
  %v310 = vunpack.c.l.b16 %v79
  %v311 = vunpack.c.l.b16 %v80
  %v312 = vunpack.c.l.b16 %v81
  %v313 = vunpack.c.l.b16 %v82
  %v314 = vunpack.c.l.b16 %v83
  %v315 = vunpack.c.l.b16 %v84
  %v316 = vunpack.c.l.b16 %v85
  %v317 = vunpack.c.l.b16 %v86
  %v318 = vunpack.c.l.b16 %v87
  %v319 = vunpack.c.l.b16 %v88
  %v320 = vunpack.c.l.b16 %v89
  %v321 = vunpack.c.l.b16 %v90
  %v322 = vunpack.c.l.b16 %v91
  %v323 = vunpack.c.l.b16 %v92
  %v324 = vunpack.c.l.b16 %v93
  %v325 = vunpack.c.l.b16 %v94
  %v326 = vpack.c.b16 %v311, %v310
  %v327 = vpack.c.b16 %v313, %v312
  %v328 = vpack.c.b16 %v315, %v314
  %v329 = vpack.c.b16 %v317, %v316
  %v330 = vpack.c.b16 %v319, %v318
  %v331 = vpack.c.b16 %v321, %v320
  %v332 = vpack.c.b16 %v323, %v322
  %v333 = vpack.c.b16 %v325, %v324
  %342 = vmatprep.subr.bf16.mxu0 0
  %343 = vmatpush1.bf16.msra.mxu0 %v333
  %344 = vmatprep.subr.bf16.mxu0 0
  %345 = vmatpush1.bf16.msra.mxu0 %v332
  %346 = vmatprep.subr.bf16.mxu0 0
  %347 = vmatpush1.bf16.msra.mxu0 %v331
  %348 = vmatprep.subr.bf16.mxu0 0
  %349 = vmatpush1.bf16.msra.mxu0 %v330
  %350 = vmatprep.subr.bf16.mxu0 0
  %351 = vmatpush1.bf16.msra.mxu0 %v329
  %352 = vmatprep.subr.bf16.mxu0 0
  %353 = vmatpush1.bf16.msra.mxu0 %v328
  %354 = vmatprep.subr.bf16.mxu0 0
  %355 = vmatpush1.bf16.msra.mxu0 %v327
  %356 = vmatprep.subr.bf16.mxu0 0
  %357 = vmatpush1.bf16.msra.mxu0 %v326
  %358 = vmatprep.subr.bf16.mxu0 0
  %359 = vmatpush2.bf16.msra.mxu0 0
  %360 = vmatprep.subr.bf16.mxu0 0
  %361 = vmatpush2.bf16.msra.mxu0 0
  %362 = vmatprep.subr.bf16.mxu0 0
  %363 = vmatpush2.bf16.msra.mxu0 0
  %364 = vmatprep.subr.bf16.mxu0 0
  %365 = vmatpush2.bf16.msra.mxu0 0
  %366 = vmatprep.subr.bf16.mxu0 0
  %367 = vmatpush2.bf16.msra.mxu0 0
  %368 = vmatprep.subr.bf16.mxu0 0
  %369 = vmatpush2.bf16.msra.mxu0 0
  %370 = vmatprep.subr.bf16.mxu0 0
  %371 = vmatpush2.bf16.msra.mxu0 0
  %372 = vmatprep.subr.bf16.mxu0 0
  %373 = vmatpush2.bf16.msra.mxu0 0
  %374 = vmatprep.mubr.bf16.mxu0 0
  %375 = vmatmul.mubr.bf16.gmra.mxu0 %v230
  %v376 = vpop.f32.mrf.mxu0
  %v377 = vadd.f32 %v100, %v376
  %v378 = vpop.f32.mrf.mxu0
  %v379 = vpop.f32.mrf.mxu0
  %v380 = vadd.f32 %v100, %v379
  %v381 = vpop.f32.mrf.mxu0
  %382 = vmatprep.mubr.bf16.mxu0 0
  %383 = vmatmul.mubr.bf16.gmra.mxu0 %v231
  %v384 = vpop.f32.mrf.mxu0
  %v385 = vadd.f32 %v100, %v384
  %v386 = vpop.f32.mrf.mxu0
  %v387 = vpop.f32.mrf.mxu0
  %v388 = vadd.f32 %v100, %v387
  %v389 = vpop.f32.mrf.mxu0
  %390 = vmatprep.mubr.bf16.mxu0 0
  %391 = vmatmul.mubr.bf16.gmra.mxu0 %v232
  %v392 = vpop.f32.mrf.mxu0
  %v393 = vadd.f32 %v100, %v392
  %v394 = vpop.f32.mrf.mxu0
  %v395 = vpop.f32.mrf.mxu0
  %v396 = vadd.f32 %v100, %v395
  %v397 = vpop.f32.mrf.mxu0
  %398 = vmatprep.mubr.bf16.mxu0 0
  %399 = vmatmul.mubr.bf16.gmra.mxu0 %v233
  %v400 = vpop.f32.mrf.mxu0
  %v401 = vadd.f32 %v100, %v400
  %v402 = vpop.f32.mrf.mxu0
  %v403 = vpop.f32.mrf.mxu0
  %v404 = vadd.f32 %v100, %v403
  %v405 = vpop.f32.mrf.mxu0
  %406 = vmatprep.mubr.bf16.mxu0 0
  %407 = vmatmul.mubr.bf16.gmra.mxu0 %v234
  %v408 = vpop.f32.mrf.mxu0
  %v409 = vadd.f32 %v100, %v408
  %v410 = vpop.f32.mrf.mxu0
  %v411 = vpop.f32.mrf.mxu0
  %v412 = vadd.f32 %v100, %v411
  %v413 = vpop.f32.mrf.mxu0
  %414 = vmatprep.mubr.bf16.mxu0 0
  %415 = vmatmul.mubr.bf16.gmra.mxu0 %v235
  %v416 = vpop.f32.mrf.mxu0
  %v417 = vadd.f32 %v100, %v416
  %v418 = vpop.f32.mrf.mxu0
  %v419 = vpop.f32.mrf.mxu0
  %v420 = vadd.f32 %v100, %v419
  %v421 = vpop.f32.mrf.mxu0
  %422 = vmatprep.mubr.bf16.mxu0 0
  %423 = vmatmul.mubr.bf16.gmra.mxu0 %v236
  %v424 = vpop.f32.mrf.mxu0
  %v425 = vadd.f32 %v100, %v424
  %v426 = vpop.f32.mrf.mxu0
  %v427 = vpop.f32.mrf.mxu0
  %v428 = vadd.f32 %v100, %v427
  %v429 = vpop.f32.mrf.mxu0
  %430 = vmatprep.mubr.bf16.mxu0 0
  %431 = vmatmul.mubr.bf16.gmra.mxu0 %v237
  %v432 = vpop.f32.mrf.mxu0
  %v433 = vadd.f32 %v100, %v432
  %v434 = vpop.f32.mrf.mxu0
  %v435 = vpop.f32.mrf.mxu0
  %v436 = vadd.f32 %v100, %v435
  %v437 = vpop.f32.mrf.mxu0
  %438 = vmatprep.mubr.bf16.mxu0 0
  %439 = vmatmul.mubr.bf16.gmra.mxu0 %v238
  %v440 = vpop.f32.mrf.mxu0
  %v441 = vadd.f32 %v100, %v440
  %v442 = vpop.f32.mrf.mxu0
  %v443 = vpop.f32.mrf.mxu0
  %v444 = vadd.f32 %v100, %v443
  %v445 = vpop.f32.mrf.mxu0
  %446 = vmatprep.mubr.bf16.mxu0 0
  %447 = vmatmul.mubr.bf16.gmra.mxu0 %v239
  %v448 = vpop.f32.mrf.mxu0
  %v449 = vadd.f32 %v100, %v448
  %v450 = vpop.f32.mrf.mxu0
  %v451 = vpop.f32.mrf.mxu0
  %v452 = vadd.f32 %v100, %v451
  %v453 = vpop.f32.mrf.mxu0
  %454 = vmatprep.mubr.bf16.mxu0 0
  %455 = vmatmul.mubr.bf16.gmra.mxu0 %v240
  %v456 = vpop.f32.mrf.mxu0
  %v457 = vadd.f32 %v100, %v456
  %v458 = vpop.f32.mrf.mxu0
  %v459 = vpop.f32.mrf.mxu0
  %v460 = vadd.f32 %v100, %v459
  %v461 = vpop.f32.mrf.mxu0
  %462 = vmatprep.mubr.bf16.mxu0 0
  %463 = vmatmul.mubr.bf16.gmra.mxu0 %v241
  %v464 = vpop.f32.mrf.mxu0
  %v465 = vadd.f32 %v100, %v464
  %v466 = vpop.f32.mrf.mxu0
  %v467 = vpop.f32.mrf.mxu0
  %v468 = vadd.f32 %v100, %v467
  %v469 = vpop.f32.mrf.mxu0
  %470 = vmatprep.mubr.bf16.mxu0 0
  %471 = vmatmul.mubr.bf16.gmra.mxu0 %v242
  %v472 = vpop.f32.mrf.mxu0
  %v473 = vadd.f32 %v100, %v472
  %v474 = vpop.f32.mrf.mxu0
  %v475 = vpop.f32.mrf.mxu0
  %v476 = vadd.f32 %v100, %v475
  %v477 = vpop.f32.mrf.mxu0
  %478 = vmatprep.mubr.bf16.mxu0 0
  %479 = vmatmul.mubr.bf16.gmra.mxu0 %v243
  %v480 = vpop.f32.mrf.mxu0
  %v481 = vadd.f32 %v100, %v480
  %v482 = vpop.f32.mrf.mxu0
  %v483 = vpop.f32.mrf.mxu0
  %v484 = vadd.f32 %v100, %v483
  %v485 = vpop.f32.mrf.mxu0
  %486 = vmatprep.mubr.bf16.mxu0 0
  %487 = vmatmul.mubr.bf16.gmra.mxu0 %v244
  %v488 = vpop.f32.mrf.mxu0
  %v489 = vadd.f32 %v100, %v488
  %v490 = vpop.f32.mrf.mxu0
  %v491 = vpop.f32.mrf.mxu0
  %v492 = vadd.f32 %v100, %v491
  %v493 = vpop.f32.mrf.mxu0
  %494 = vmatprep.mubr.bf16.mxu0 0
  %495 = vmatmul.mubr.bf16.gmra.mxu0 %v245
  %v496 = vpop.f32.mrf.mxu0
  %v497 = vadd.f32 %v100, %v496
  %v498 = vpop.f32.mrf.mxu0
  %v499 = vpop.f32.mrf.mxu0
  %v500 = vadd.f32 %v100, %v499
  %v501 = vpop.f32.mrf.mxu0
  %502 = vmatprep.mubr.bf16.mxu0 0
  %503 = vmatmul.mubr.bf16.gmra.mxu0 %v246
  %v504 = vpop.f32.mrf.mxu0
  %v505 = vadd.f32 %v100, %v504
  %v506 = vpop.f32.mrf.mxu0
  %v507 = vpop.f32.mrf.mxu0
  %v508 = vadd.f32 %v100, %v507
  %v509 = vpop.f32.mrf.mxu0
  %510 = vmatprep.mubr.bf16.mxu0 0
  %511 = vmatmul.mubr.bf16.gmra.mxu0 %v247
  %v512 = vpop.f32.mrf.mxu0
  %v513 = vadd.f32 %v100, %v512
  %v514 = vpop.f32.mrf.mxu0
  %v515 = vpop.f32.mrf.mxu0
  %v516 = vadd.f32 %v100, %v515
  %v517 = vpop.f32.mrf.mxu0
  %518 = vmatprep.mubr.bf16.mxu0 0
  %519 = vmatmul.mubr.bf16.gmra.mxu0 %v248
  %v520 = vpop.f32.mrf.mxu0
  %v521 = vadd.f32 %v100, %v520
  %v522 = vpop.f32.mrf.mxu0
  %v523 = vpop.f32.mrf.mxu0
  %v524 = vadd.f32 %v100, %v523
  %v525 = vpop.f32.mrf.mxu0
  %526 = vmatprep.mubr.bf16.mxu0 0
  %527 = vmatmul.mubr.bf16.gmra.mxu0 %v249
  %v528 = vpop.f32.mrf.mxu0
  %v529 = vadd.f32 %v100, %v528
  %v530 = vpop.f32.mrf.mxu0
  %v531 = vpop.f32.mrf.mxu0
  %v532 = vadd.f32 %v100, %v531
  %v533 = vpop.f32.mrf.mxu0
  %534 = vmatprep.mubr.bf16.mxu0 0
  %535 = vmatmul.mubr.bf16.gmra.mxu0 %v250
  %v536 = vpop.f32.mrf.mxu0
  %v537 = vadd.f32 %v100, %v536
  %v538 = vpop.f32.mrf.mxu0
  %v539 = vpop.f32.mrf.mxu0
  %v540 = vadd.f32 %v100, %v539
  %v541 = vpop.f32.mrf.mxu0
  %542 = vmatprep.mubr.bf16.mxu0 0
  %543 = vmatmul.mubr.bf16.gmra.mxu0 %v251
  %v544 = vpop.f32.mrf.mxu0
  %v545 = vadd.f32 %v100, %v544
  %v546 = vpop.f32.mrf.mxu0
  %v547 = vpop.f32.mrf.mxu0
  %v548 = vadd.f32 %v100, %v547
  %v549 = vpop.f32.mrf.mxu0
  %550 = vmatprep.mubr.bf16.mxu0 0
  %551 = vmatmul.mubr.bf16.gmra.mxu0 %v252
  %v552 = vpop.f32.mrf.mxu0
  %v553 = vadd.f32 %v100, %v552
  %v554 = vpop.f32.mrf.mxu0
  %v555 = vpop.f32.mrf.mxu0
  %v556 = vadd.f32 %v100, %v555
  %v557 = vpop.f32.mrf.mxu0
  %558 = vmatprep.mubr.bf16.mxu0 0
  %559 = vmatmul.mubr.bf16.gmra.mxu0 %v253
  %v560 = vpop.f32.mrf.mxu0
  %v561 = vadd.f32 %v100, %v560
  %v562 = vpop.f32.mrf.mxu0
  %v563 = vpop.f32.mrf.mxu0
  %v564 = vadd.f32 %v100, %v563
  %v565 = vpop.f32.mrf.mxu0
  %566 = vmatprep.mubr.bf16.mxu0 0
  %567 = vmatmul.mubr.bf16.gmra.mxu0 %v254
  %v568 = vpop.f32.mrf.mxu0
  %v569 = vadd.f32 %v100, %v568
  %v570 = vpop.f32.mrf.mxu0
  %v571 = vpop.f32.mrf.mxu0
  %v572 = vadd.f32 %v100, %v571
  %v573 = vpop.f32.mrf.mxu0
  %574 = vmatprep.mubr.bf16.mxu0 0
  %575 = vmatmul.mubr.bf16.gmra.mxu0 %v255
  %v576 = vpop.f32.mrf.mxu0
  %v577 = vadd.f32 %v100, %v576
  %v578 = vpop.f32.mrf.mxu0
  %v579 = vpop.f32.mrf.mxu0
  %v580 = vadd.f32 %v100, %v579
  %v581 = vpop.f32.mrf.mxu0
  %582 = vmatprep.mubr.bf16.mxu0 0
  %583 = vmatmul.mubr.bf16.gmra.mxu0 %v256
  %v584 = vpop.f32.mrf.mxu0
  %v585 = vadd.f32 %v100, %v584
  %v586 = vpop.f32.mrf.mxu0
  %v587 = vpop.f32.mrf.mxu0
  %v588 = vadd.f32 %v100, %v587
  %v589 = vpop.f32.mrf.mxu0
  %590 = vmatprep.mubr.bf16.mxu0 0
  %591 = vmatmul.mubr.bf16.gmra.mxu0 %v257
  %v592 = vpop.f32.mrf.mxu0
  %v593 = vadd.f32 %v100, %v592
  %v594 = vpop.f32.mrf.mxu0
  %v595 = vpop.f32.mrf.mxu0
  %v596 = vadd.f32 %v100, %v595
  %v597 = vpop.f32.mrf.mxu0
  %598 = vmatprep.mubr.bf16.mxu0 0
  %599 = vmatmul.mubr.bf16.gmra.mxu0 %v258
  %v600 = vpop.f32.mrf.mxu0
  %v601 = vadd.f32 %v100, %v600
  %v602 = vpop.f32.mrf.mxu0
  %v603 = vpop.f32.mrf.mxu0
  %v604 = vadd.f32 %v100, %v603
  %v605 = vpop.f32.mrf.mxu0
  %606 = vmatprep.mubr.bf16.mxu0 0
  %607 = vmatmul.mubr.bf16.gmra.mxu0 %v259
  %v608 = vpop.f32.mrf.mxu0
  %v609 = vadd.f32 %v100, %v608
  %v610 = vpop.f32.mrf.mxu0
  %v611 = vpop.f32.mrf.mxu0
  %v612 = vadd.f32 %v100, %v611
  %v613 = vpop.f32.mrf.mxu0
  %614 = vmatprep.mubr.bf16.mxu0 0
  %615 = vmatmul.mubr.bf16.gmra.mxu0 %v260
  %v616 = vpop.f32.mrf.mxu0
  %v617 = vadd.f32 %v100, %v616
  %v618 = vpop.f32.mrf.mxu0
  %v619 = vpop.f32.mrf.mxu0
  %v620 = vadd.f32 %v100, %v619
  %v621 = vpop.f32.mrf.mxu0
  %622 = vmatprep.mubr.bf16.mxu0 0
  %623 = vmatmul.mubr.bf16.gmra.mxu0 %v261
  %v624 = vpop.f32.mrf.mxu0
  %v625 = vadd.f32 %v100, %v624
  %v626 = vpop.f32.mrf.mxu0
  %v627 = vpop.f32.mrf.mxu0
  %v628 = vadd.f32 %v100, %v627
  %v629 = vpop.f32.mrf.mxu0
  %630 = vdwg.mxu0
  %v631 = vmul.f32 %v377, 0.2
  %v632 = vmul.f32 %v380, 0.2
  %v633 = vmul.f32 %v385, 0.2
  %v634 = vmul.f32 %v388, 0.2
  %v635 = vmul.f32 %v393, 0.2
  %v636 = vmul.f32 %v396, 0.2
  %v637 = vmul.f32 %v401, 0.2
  %v638 = vmul.f32 %v404, 0.2
  %v639 = vmul.f32 %v409, 0.2
  %v640 = vmul.f32 %v412, 0.2
  %v641 = vmul.f32 %v417, 0.2
  %v642 = vmul.f32 %v420, 0.2
  %v643 = vmul.f32 %v425, 0.2
  %v644 = vmul.f32 %v428, 0.2
  %v645 = vmul.f32 %v433, 0.2
  %v646 = vmul.f32 %v436, 0.2
  %v647 = vmul.f32 %v441, 0.2
  %v648 = vmul.f32 %v444, 0.2
  %v649 = vmul.f32 %v449, 0.2
  %v650 = vmul.f32 %v452, 0.2
  %v651 = vmul.f32 %v457, 0.2
  %v652 = vmul.f32 %v460, 0.2
  %v653 = vmul.f32 %v465, 0.2
  %v654 = vmul.f32 %v468, 0.2
  %v655 = vmul.f32 %v473, 0.2
  %v656 = vmul.f32 %v476, 0.2
  %v657 = vmul.f32 %v481, 0.2
  %v658 = vmul.f32 %v484, 0.2
  %v659 = vmul.f32 %v489, 0.2
  %v660 = vmul.f32 %v492, 0.2
  %v661 = vmul.f32 %v497, 0.2
  %v662 = vmul.f32 %v500, 0.2
  %v663 = vmul.f32 %v505, 0.2
  %v664 = vmul.f32 %v508, 0.2
  %v665 = vmul.f32 %v513, 0.2
  %v666 = vmul.f32 %v516, 0.2
  %v667 = vmul.f32 %v521, 0.2
  %v668 = vmul.f32 %v524, 0.2
  %v669 = vmul.f32 %v529, 0.2
  %v670 = vmul.f32 %v532, 0.2
  %v671 = vmul.f32 %v537, 0.2
  %v672 = vmul.f32 %v540, 0.2
  %v673 = vmul.f32 %v545, 0.2
  %v674 = vmul.f32 %v548, 0.2
  %v675 = vmul.f32 %v553, 0.2
  %v676 = vmul.f32 %v556, 0.2
  %v677 = vmul.f32 %v561, 0.2
  %v678 = vmul.f32 %v564, 0.2
  %v679 = vmul.f32 %v569, 0.2
  %v680 = vmul.f32 %v572, 0.2
  %v681 = vmul.f32 %v577, 0.2
  %v682 = vmul.f32 %v580, 0.2
  %v683 = vmul.f32 %v585, 0.2
  %v684 = vmul.f32 %v588, 0.2
  %v685 = vmul.f32 %v593, 0.2
  %v686 = vmul.f32 %v596, 0.2
  %v687 = vmul.f32 %v601, 0.2
  %v688 = vmul.f32 %v604, 0.2
  %v689 = vmul.f32 %v609, 0.2
  %v690 = vmul.f32 %v612, 0.2
  %v691 = vmul.f32 %v617, 0.2
  %v692 = vmul.f32 %v620, 0.2
  %v693 = vmul.f32 %v625, 0.2
  %v694 = vmul.f32 %v628, 0.2
  %v695 = vmax.f32 %v377, %v631
  %v696 = vmax.f32 %v380, %v632
  %v697 = vmax.f32 %v385, %v633
  %v698 = vmax.f32 %v388, %v634
  %v699 = vmax.f32 %v393, %v635
  %v700 = vmax.f32 %v396, %v636
  %v701 = vmax.f32 %v401, %v637
  %v702 = vmax.f32 %v404, %v638
  %v703 = vmax.f32 %v409, %v639
  %v704 = vmax.f32 %v412, %v640
  %v705 = vmax.f32 %v417, %v641
  %v706 = vmax.f32 %v420, %v642
  %v707 = vmax.f32 %v425, %v643
  %v708 = vmax.f32 %v428, %v644
  %v709 = vmax.f32 %v433, %v645
  %v710 = vmax.f32 %v436, %v646
  %v711 = vmax.f32 %v441, %v647
  %v712 = vmax.f32 %v444, %v648
  %v713 = vmax.f32 %v449, %v649
  %v714 = vmax.f32 %v452, %v650
  %v715 = vmax.f32 %v457, %v651
  %v716 = vmax.f32 %v460, %v652
  %v717 = vmax.f32 %v465, %v653
  %v718 = vmax.f32 %v468, %v654
  %v719 = vmax.f32 %v473, %v655
  %v720 = vmax.f32 %v476, %v656
  %v721 = vmax.f32 %v481, %v657
  %v722 = vmax.f32 %v484, %v658
  %v723 = vmax.f32 %v489, %v659
  %v724 = vmax.f32 %v492, %v660
  %v725 = vmax.f32 %v497, %v661
  %v726 = vmax.f32 %v500, %v662
  %v727 = vmax.f32 %v505, %v663
  %v728 = vmax.f32 %v508, %v664
  %v729 = vmax.f32 %v513, %v665
  %v730 = vmax.f32 %v516, %v666
  %v731 = vmax.f32 %v521, %v667
  %v732 = vmax.f32 %v524, %v668
  %v733 = vmax.f32 %v529, %v669
  %v734 = vmax.f32 %v532, %v670
  %v735 = vmax.f32 %v537, %v671
  %v736 = vmax.f32 %v540, %v672
  %v737 = vmax.f32 %v545, %v673
  %v738 = vmax.f32 %v548, %v674
  %v739 = vmax.f32 %v553, %v675
  %v740 = vmax.f32 %v556, %v676
  %v741 = vmax.f32 %v561, %v677
  %v742 = vmax.f32 %v564, %v678
  %v743 = vmax.f32 %v569, %v679
  %v744 = vmax.f32 %v572, %v680
  %v745 = vmax.f32 %v577, %v681
  %v746 = vmax.f32 %v580, %v682
  %v747 = vmax.f32 %v585, %v683
  %v748 = vmax.f32 %v588, %v684
  %v749 = vmax.f32 %v593, %v685
  %v750 = vmax.f32 %v596, %v686
  %v751 = vmax.f32 %v601, %v687
  %v752 = vmax.f32 %v604, %v688
  %v753 = vmax.f32 %v609, %v689
  %v754 = vmax.f32 %v612, %v690
  %v755 = vmax.f32 %v617, %v691
  %v756 = vmax.f32 %v620, %v692
  %v757 = vmax.f32 %v625, %v693
  %v758 = vmax.f32 %v628, %v694
  %759 = vst [vmem:[%s3] sm:$0xff] %v695
  %760 = vst [vmem:[%s3 + $0x8] sm:$0xff] %v696
  %761 = vst [vmem:[%s3 + $0x10] sm:$0xff] %v697
  %762 = vst [vmem:[%s3 + $0x18] sm:$0xff] %v698
  %763 = vst [vmem:[%s3 + $0x20] sm:$0xff] %v699
  %764 = vst [vmem:[%s3 + $0x28] sm:$0xff] %v700
  %765 = vst [vmem:[%s3 + $0x30] sm:$0xff] %v701
  %766 = vst [vmem:[%s3 + $0x38] sm:$0xff] %v702
  %767 = vst [vmem:[%s3 + $0x40] sm:$0xff] %v703
  %768 = vst [vmem:[%s3 + $0x48] sm:$0xff] %v704
  %769 = vst [vmem:[%s3 + $0x50] sm:$0xff] %v705
  %770 = vst [vmem:[%s3 + $0x58] sm:$0xff] %v706
  %771 = vst [vmem:[%s3 + $0x60] sm:$0xff] %v707
  %772 = vst [vmem:[%s3 + $0x68] sm:$0xff] %v708
  %773 = vst [vmem:[%s3 + $0x70] sm:$0xff] %v709
  %774 = vst [vmem:[%s3 + $0x78] sm:$0xff] %v710
  %775 = vst [vmem:[%s3 + $0x80] sm:$0xff] %v711
  %776 = vst [vmem:[%s3 + $0x88] sm:$0xff] %v712
  %777 = vst [vmem:[%s3 + $0x90] sm:$0xff] %v713
  %778 = vst [vmem:[%s3 + $0x98] sm:$0xff] %v714
  %779 = vst [vmem:[%s3 + $0xa0] sm:$0xff] %v715
  %780 = vst [vmem:[%s3 + $0xa8] sm:$0xff] %v716
  %781 = vst [vmem:[%s3 + $0xb0] sm:$0xff] %v717
  %782 = vst [vmem:[%s3 + $0xb8] sm:$0xff] %v718
  %783 = vst [vmem:[%s3 + $0xc0] sm:$0xff] %v719
  %784 = vst [vmem:[%s3 + $0xc8] sm:$0xff] %v720
  %785 = vst [vmem:[%s3 + $0xd0] sm:$0xff] %v721
  %786 = vst [vmem:[%s3 + $0xd8] sm:$0xff] %v722
  %787 = vst [vmem:[%s3 + $0xe0] sm:$0xff] %v723
  %788 = vst [vmem:[%s3 + $0xe8] sm:$0xff] %v724
  %789 = vst [vmem:[%s3 + $0xf0] sm:$0xff] %v725
  %790 = vst [vmem:[%s3 + $0xf8] sm:$0xff] %v726
  %791 = vst [vmem:[%s3 + $0x100] sm:$0xff] %v727
  %792 = vst [vmem:[%s3 + $0x108] sm:$0xff] %v728
  %793 = vst [vmem:[%s3 + $0x110] sm:$0xff] %v729
  %794 = vst [vmem:[%s3 + $0x118] sm:$0xff] %v730
  %795 = vst [vmem:[%s3 + $0x120] sm:$0xff] %v731
  %796 = vst [vmem:[%s3 + $0x128] sm:$0xff] %v732
  %797 = vst [vmem:[%s3 + $0x130] sm:$0xff] %v733
  %798 = vst [vmem:[%s3 + $0x138] sm:$0xff] %v734
  %799 = vst [vmem:[%s3 + $0x140] sm:$0xff] %v735
  %800 = vst [vmem:[%s3 + $0x148] sm:$0xff] %v736
  %801 = vst [vmem:[%s3 + $0x150] sm:$0xff] %v737
  %802 = vst [vmem:[%s3 + $0x158] sm:$0xff] %v738
  %803 = vst [vmem:[%s3 + $0x160] sm:$0xff] %v739
  %804 = vst [vmem:[%s3 + $0x168] sm:$0xff] %v740
  %805 = vst [vmem:[%s3 + $0x170] sm:$0xff] %v741
  %806 = vst [vmem:[%s3 + $0x178] sm:$0xff] %v742
  %807 = vst [vmem:[%s3 + $0x180] sm:$0xff] %v743
  %808 = vst [vmem:[%s3 + $0x188] sm:$0xff] %v744
  %809 = vst [vmem:[%s3 + $0x190] sm:$0xff] %v745
  %810 = vst [vmem:[%s3 + $0x198] sm:$0xff] %v746
  %811 = vst [vmem:[%s3 + $0x1a0] sm:$0xff] %v747
  %812 = vst [vmem:[%s3 + $0x1a8] sm:$0xff] %v748
  %813 = vst [vmem:[%s3 + $0x1b0] sm:$0xff] %v749
  %814 = vst [vmem:[%s3 + $0x1b8] sm:$0xff] %v750
  %815 = vst [vmem:[%s3 + $0x1c0] sm:$0xff] %v751
  %816 = vst [vmem:[%s3 + $0x1c8] sm:$0xff] %v752
  %817 = vst [vmem:[%s3 + $0x1d0] sm:$0xff] %v753
  %818 = vst [vmem:[%s3 + $0x1d8] sm:$0xff] %v754
  %819 = vst [vmem:[%s3 + $0x1e0] sm:$0xff] %v755
  %820 = vst [vmem:[%s3 + $0x1e8] sm:$0xff] %v756
  %821 = vst [vmem:[%s3 + $0x1f0] sm:$0xff] %v757
  %822 = vst [vmem:[%s3 + $0x1f8] sm:$0xff] %v758
  // Predicated region
  $region14: #{_lambda_.8} parent=0 // pred_check
    _
  $region15: #{_lambda_.8} parent=0 // pred_check_branch
    %824 = sbr.rel (0) target = $region17
  $region16: #{_lambda_.8} parent=0 // pred_region
    _
  $region17: #{_lambda_.8} parent=0 // pred_fallthru
    _
  // Predicated region
  $region18: #{_lambda_.8} parent=0 // pred_check
    _
  $region19: #{_lambda_.8} parent=0 // pred_check_branch
    %826 = sbr.rel (0) target = $region21
  $region20: #{_lambda_.8} parent=0 // pred_region
    _
  $region21: #{_lambda_.8} parent=0 // pred_fallthru
    _

// kernel: _lambda_.9
$region0: #{_lambda_.9}
  #allocation0 [shape = 'u32[]', space=smem, size = 0x4, offset = 0x4, fixed_abs, tag = 'smem constant byte address 0x4 - core index']
  #allocation1 [shape = 'u32[144,128]{1,0:T(1,128)}', space=vmem, size = 0x12000, scoped, tag = 'internal scratch']
  %s0 = inlined_call_operand.vmem [shape: bf16[128,128], index: 0, kind: input, shape index: {}]
  %s1 = inlined_call_operand.vmem [shape: bf16[128,128], index: 1, kind: input, shape index: {}]
  %s2 = inlined_call_operand.vmem [shape: f32[128,128], index: 2, kind: output, shape index: {0}]
  %s3 = inlined_call_operand.vmem [shape: f32[8,128], index: 3, kind: output, shape index: {1}]
  %4 = xla_tuple %s2, %s3
  %s5 = sld [smem:[#allocation0]]
  $region26: #{_lambda_.9} parent=0
    _
  %s7 = ssub.s32 1, %s5
  %s8 = scalar_select 0, %s7, %s5
  // Predicated region
  $region2: #{_lambda_.9} parent=0 // pred_check
    _
  $region3: #{_lambda_.9} parent=0 // pred_check_branch
    %10 = sbr.rel (0) target = $region5
  $region4: #{_lambda_.9} parent=0 // pred_region
    _
  $region5: #{_lambda_.9} parent=0 // pred_fallthru
    _
  // Predicated region
  $region6: #{_lambda_.9} parent=0 // pred_check
    _
  $region7: #{_lambda_.9} parent=0 // pred_check_branch
    %12 = sbr.rel (0) target = $region9
  $region8: #{_lambda_.9} parent=0 // pred_region
    _
  $region9: #{_lambda_.9} parent=0 // pred_fallthru
    _
  %v14 = vld [vmem:[%s0] sm:$0xf]
  %v15 = vld [vmem:[%s0 + $0x4] sm:$0xf]
  %v16 = vld [vmem:[%s0 + $0x8] sm:$0xf]
  %v17 = vld [vmem:[%s0 + $0xc] sm:$0xf]
  %v18 = vld [vmem:[%s0 + $0x10] sm:$0xf]
  %v19 = vld [vmem:[%s0 + $0x14] sm:$0xf]
  %v20 = vld [vmem:[%s0 + $0x18] sm:$0xf]
  %v21 = vld [vmem:[%s0 + $0x1c] sm:$0xf]
  %v22 = vld [vmem:[%s0 + $0x20] sm:$0xf]
  %v23 = vld [vmem:[%s0 + $0x24] sm:$0xf]
  %v24 = vld [vmem:[%s0 + $0x28] sm:$0xf]
  %v25 = vld [vmem:[%s0 + $0x2c] sm:$0xf]
  %v26 = vld [vmem:[%s0 + $0x30] sm:$0xf]
  %v27 = vld [vmem:[%s0 + $0x34] sm:$0xf]
  %v28 = vld [vmem:[%s0 + $0x38] sm:$0xf]
  %v29 = vld [vmem:[%s0 + $0x3c] sm:$0xf]
  %v30 = vld [vmem:[%s1] sm:$0xf]
  %v31 = vld [vmem:[%s1 + $0x4] sm:$0xf]
  %v32 = vld [vmem:[%s1 + $0x8] sm:$0xf]
  %v33 = vld [vmem:[%s1 + $0xc] sm:$0xf]
  %v34 = vld [vmem:[%s1 + $0x10] sm:$0xf]
  %v35 = vld [vmem:[%s1 + $0x14] sm:$0xf]
  %v36 = vld [vmem:[%s1 + $0x18] sm:$0xf]
  %v37 = vld [vmem:[%s1 + $0x1c] sm:$0xf]
  %v38 = vld [vmem:[%s1 + $0x20] sm:$0xf]
  %v39 = vld [vmem:[%s1 + $0x24] sm:$0xf]
  %v40 = vld [vmem:[%s1 + $0x28] sm:$0xf]
  %v41 = vld [vmem:[%s1 + $0x2c] sm:$0xf]
  %v42 = vld [vmem:[%s1 + $0x30] sm:$0xf]
  %v43 = vld [vmem:[%s1 + $0x34] sm:$0xf]
  %v44 = vld [vmem:[%s1 + $0x38] sm:$0xf]
  %v45 = vld [vmem:[%s1 + $0x3c] sm:$0xf]
  %v62 = vunpack.c.l.b16 %v14
  %v63 = vunpack.c.l.b16 %v15
  %v64 = vunpack.c.l.b16 %v16
  %v65 = vunpack.c.l.b16 %v17
  %v66 = vunpack.c.l.b16 %v18
  %v67 = vunpack.c.l.b16 %v19
  %v68 = vunpack.c.l.b16 %v20
  %v69 = vunpack.c.l.b16 %v21
  %v70 = vunpack.c.l.b16 %v22
  %v71 = vunpack.c.l.b16 %v23
  %v72 = vunpack.c.l.b16 %v24
  %v73 = vunpack.c.l.b16 %v25
  %v74 = vunpack.c.l.b16 %v26
  %v75 = vunpack.c.l.b16 %v27
  %v76 = vunpack.c.l.b16 %v28
  %v77 = vunpack.c.l.b16 %v29
  %v78 = vpack.c.b16 %v63, %v62
  %v79 = vpack.c.b16 %v65, %v64
  %v80 = vpack.c.b16 %v67, %v66
  %v81 = vpack.c.b16 %v69, %v68
  %v82 = vpack.c.b16 %v71, %v70
  %v83 = vpack.c.b16 %v73, %v72
  %v84 = vpack.c.b16 %v75, %v74
  %v85 = vpack.c.b16 %v77, %v76
  %v110 = vunpack.c.l.b16 %v30
  %v111 = vunpack.c.l.b16 %v31
  %v112 = vunpack.c.l.b16 %v32
  %v113 = vunpack.c.l.b16 %v33
  %v114 = vunpack.c.l.b16 %v34
  %v115 = vunpack.c.l.b16 %v35
  %v116 = vunpack.c.l.b16 %v36
  %v117 = vunpack.c.l.b16 %v37
  %v118 = vunpack.c.l.b16 %v38
  %v119 = vunpack.c.l.b16 %v39
  %v120 = vunpack.c.l.b16 %v40
  %v121 = vunpack.c.l.b16 %v41
  %v122 = vunpack.c.l.b16 %v42
  %v123 = vunpack.c.l.b16 %v43
  %v124 = vunpack.c.l.b16 %v44
  %v125 = vunpack.c.l.b16 %v45
  %v126 = vpack.c.b16 %v111, %v110
  %v127 = vpack.c.b16 %v113, %v112
  %v128 = vpack.c.b16 %v115, %v114
  %v129 = vpack.c.b16 %v117, %v116
  %v130 = vpack.c.b16 %v119, %v118
  %v131 = vpack.c.b16 %v121, %v120
  %v132 = vpack.c.b16 %v123, %v122
  %v133 = vpack.c.b16 %v125, %v124
  %142 = vmatprep.subr.bf16.mxu0 0
  %143 = vmatpush1.bf16.msra.mxu0 %v133
  %144 = vmatprep.subr.bf16.mxu0 0
  %145 = vmatpush1.bf16.msra.mxu0 %v132
  %146 = vmatprep.subr.bf16.mxu0 0
  %147 = vmatpush1.bf16.msra.mxu0 %v131
  %148 = vmatprep.subr.bf16.mxu0 0
  %149 = vmatpush1.bf16.msra.mxu0 %v130
  %150 = vmatprep.subr.bf16.mxu0 0
  %151 = vmatpush1.bf16.msra.mxu0 %v129
  %152 = vmatprep.subr.bf16.mxu0 0
  %153 = vmatpush1.bf16.msra.mxu0 %v128
  %154 = vmatprep.subr.bf16.mxu0 0
  %155 = vmatpush1.bf16.msra.mxu0 %v127
  %156 = vmatprep.subr.bf16.mxu0 0
  %157 = vmatpush1.bf16.msra.mxu0 %v126
  %158 = vmatprep.subr.bf16.mxu0 0
  %159 = vmatpush2.bf16.msra.mxu0 0
  %160 = vmatprep.subr.bf16.mxu0 0
  %161 = vmatpush2.bf16.msra.mxu0 0
  %162 = vmatprep.subr.bf16.mxu0 0
  %163 = vmatpush2.bf16.msra.mxu0 0
  %164 = vmatprep.subr.bf16.mxu0 0
  %165 = vmatpush2.bf16.msra.mxu0 0
  %166 = vmatprep.subr.bf16.mxu0 0
  %167 = vmatpush2.bf16.msra.mxu0 0
  %168 = vmatprep.subr.bf16.mxu0 0
  %169 = vmatpush2.bf16.msra.mxu0 0
  %170 = vmatprep.subr.bf16.mxu0 0
  %171 = vmatpush2.bf16.msra.mxu0 0
  %172 = vmatprep.subr.bf16.mxu0 0
  %173 = vmatpush2.bf16.msra.mxu0 0
  %174 = vmatprep.mubr.bf16.mxu0 0
  %175 = vmatmul.mubr.bf16.gmra.mxu0 %v78
  %v176 = vpop.f32.mrf.mxu0
  %v177 = vadd.f32 0.0, %v176
  %v178 = vpop.f32.mrf.mxu0
  %v179 = vpop.f32.mrf.mxu0
  %v180 = vadd.f32 0.0, %v179
  %v181 = vpop.f32.mrf.mxu0
  %182 = vmatprep.mubr.bf16.mxu0 0
  %183 = vmatmul.mubr.bf16.gmra.mxu0 %v79
  %v184 = vpop.f32.mrf.mxu0
  %v185 = vadd.f32 0.0, %v184
  %v186 = vpop.f32.mrf.mxu0
  %v187 = vpop.f32.mrf.mxu0
  %v188 = vadd.f32 0.0, %v187
  %v189 = vpop.f32.mrf.mxu0
  %190 = vmatprep.mubr.bf16.mxu0 0
  %191 = vmatmul.mubr.bf16.gmra.mxu0 %v80
  %v192 = vpop.f32.mrf.mxu0
  %v193 = vadd.f32 0.0, %v192
  %v194 = vpop.f32.mrf.mxu0
  %v195 = vpop.f32.mrf.mxu0
  %v196 = vadd.f32 0.0, %v195
  %v197 = vpop.f32.mrf.mxu0
  %198 = vmatprep.mubr.bf16.mxu0 0
  %199 = vmatmul.mubr.bf16.gmra.mxu0 %v81
  %v200 = vpop.f32.mrf.mxu0
  %v201 = vadd.f32 0.0, %v200
  %v202 = vpop.f32.mrf.mxu0
  %v203 = vpop.f32.mrf.mxu0
  %v204 = vadd.f32 0.0, %v203
  %v205 = vpop.f32.mrf.mxu0
  %206 = vmatprep.mubr.bf16.mxu0 0
  %207 = vmatmul.mubr.bf16.gmra.mxu0 %v82
  %v208 = vpop.f32.mrf.mxu0
  %v209 = vadd.f32 0.0, %v208
  %v210 = vpop.f32.mrf.mxu0
  %v211 = vpop.f32.mrf.mxu0
  %v212 = vadd.f32 0.0, %v211
  %v213 = vpop.f32.mrf.mxu0
  %214 = vmatprep.mubr.bf16.mxu0 0
  %215 = vmatmul.mubr.bf16.gmra.mxu0 %v83
  %v216 = vpop.f32.mrf.mxu0
  %v217 = vadd.f32 0.0, %v216
  %v218 = vpop.f32.mrf.mxu0
  %v219 = vpop.f32.mrf.mxu0
  %v220 = vadd.f32 0.0, %v219
  %v221 = vpop.f32.mrf.mxu0
  %222 = vmatprep.mubr.bf16.mxu0 0
  %223 = vmatmul.mubr.bf16.gmra.mxu0 %v84
  %v224 = vpop.f32.mrf.mxu0
  %v225 = vadd.f32 0.0, %v224
  %v226 = vpop.f32.mrf.mxu0
  %v227 = vpop.f32.mrf.mxu0
  %v228 = vadd.f32 0.0, %v227
  %v229 = vpop.f32.mrf.mxu0
  %230 = vmatprep.mubr.bf16.mxu0 0
  %231 = vmatmul.mubr.bf16.gmra.mxu0 %v85
  %v232 = vpop.f32.mrf.mxu0
  %v233 = vadd.f32 0.0, %v232
  %v234 = vpop.f32.mrf.mxu0
  %v235 = vpop.f32.mrf.mxu0
  %v236 = vadd.f32 0.0, %v235
  %v237 = vpop.f32.mrf.mxu0
  %238 = vdwg.mxu0
  %239 = vst [vmem:[%s2] sm:$0xff] %v177
  %240 = vst [vmem:[%s2 + $0x8] sm:$0xff] %v180
  %241 = vst [vmem:[%s2 + $0x10] sm:$0xff] %v185
  %242 = vst [vmem:[%s2 + $0x18] sm:$0xff] %v188
  %243 = vst [vmem:[%s2 + $0x20] sm:$0xff] %v193
  %244 = vst [vmem:[%s2 + $0x28] sm:$0xff] %v196
  %245 = vst [vmem:[%s2 + $0x30] sm:$0xff] %v201
  %246 = vst [vmem:[%s2 + $0x38] sm:$0xff] %v204
  %247 = vst [vmem:[%s2 + $0x40] sm:$0xff] %v209
  %248 = vst [vmem:[%s2 + $0x48] sm:$0xff] %v212
  %249 = vst [vmem:[%s2 + $0x50] sm:$0xff] %v217
  %250 = vst [vmem:[%s2 + $0x58] sm:$0xff] %v220
  %251 = vst [vmem:[%s2 + $0x60] sm:$0xff] %v225
  %252 = vst [vmem:[%s2 + $0x68] sm:$0xff] %v228
  %253 = vst [vmem:[%s2 + $0x70] sm:$0xff] %v233
  %254 = vst [vmem:[%s2 + $0x78] sm:$0xff] %v236
  %v255 = vadd.f32 %v177, %v180
  %v256 = vadd.f32 %v255, %v185
  %v257 = vadd.f32 %v256, %v188
  %v258 = vadd.f32 %v257, %v193
  %v259 = vadd.f32 %v258, %v196
  %v260 = vadd.f32 %v259, %v201
  %v261 = vadd.f32 %v260, %v204
  %v262 = vadd.f32 %v261, %v209
  %v263 = vadd.f32 %v262, %v212
  %v264 = vadd.f32 %v263, %v217
  %v265 = vadd.f32 %v264, %v220
  %v266 = vadd.f32 %v265, %v225
  %v267 = vadd.f32 %v266, %v228
  %v268 = vadd.f32 %v267, %v233
  %v269 = vadd.f32 %v268, %v236
  %v270 = vrot.slane %v269, 4
  %v271 = vadd.f32 %v269, %v270
  %v272 = vrot.slane %v271, 2
  %v273 = vadd.f32 %v271, %v272
  %v274 = vrot.slane %v273, 1
  %v275 = vadd.f32 %v273, %v274
  %v276 = vmul.f32 %v177, %v177
  %v277 = vmul.f32 %v180, %v180
  %v278 = vmul.f32 %v185, %v185
  %v279 = vmul.f32 %v188, %v188
  %v280 = vmul.f32 %v193, %v193
  %v281 = vmul.f32 %v196, %v196
  %v282 = vmul.f32 %v201, %v201
  %v283 = vmul.f32 %v204, %v204
  %v284 = vmul.f32 %v209, %v209
  %v285 = vmul.f32 %v212, %v212
  %v286 = vmul.f32 %v217, %v217
  %v287 = vmul.f32 %v220, %v220
  %v288 = vmul.f32 %v225, %v225
  %v289 = vmul.f32 %v228, %v228
  %v290 = vmul.f32 %v233, %v233
  %v291 = vmul.f32 %v236, %v236
  %v292 = vadd.f32 %v276, %v277
  %v293 = vadd.f32 %v292, %v278
  %v294 = vadd.f32 %v293, %v279
  %v295 = vadd.f32 %v294, %v280
  %v296 = vadd.f32 %v295, %v281
  %v297 = vadd.f32 %v296, %v282
  %v298 = vadd.f32 %v297, %v283
  %v299 = vadd.f32 %v298, %v284
  %v300 = vadd.f32 %v299, %v285
  %v301 = vadd.f32 %v300, %v286
  %v302 = vadd.f32 %v301, %v287
  %v303 = vadd.f32 %v302, %v288
  %v304 = vadd.f32 %v303, %v289
  %v305 = vadd.f32 %v304, %v290
  %v306 = vadd.f32 %v305, %v291
  %v307 = vrot.slane %v306, 4
  %v308 = vadd.f32 %v306, %v307
  %v309 = vrot.slane %v308, 2
  %v310 = vadd.f32 %v308, %v309
  %v311 = vrot.slane %v310, 1
  %v312 = vadd.f32 %v310, %v311
  %vm313 = vcmask 1040384
  %v314 = vsel %vm313, %v275, %v312
  %vm315 = vcmask 1041408
  %v316 = vsel %vm315, %v314, 0.0
  %317 = vst [vmem:[%s3] sm:$0xff] %v316
  // Predicated region
  $region10: #{_lambda_.9} parent=0 // pred_check
    _
  $region11: #{_lambda_.9} parent=0 // pred_check_branch
    %319 = sbr.rel (0) target = $region13
  $region12: #{_lambda_.9} parent=0 // pred_region
    _
  $region13: #{_lambda_.9} parent=0 // pred_fallthru
    _
  // Predicated region
  $region14: #{_lambda_.9} parent=0 // pred_check
    _
  $region15: #{_lambda_.9} parent=0 // pred_check_branch
    %321 = sbr.rel (0) target = $region17
  $region16: #{_lambda_.9} parent=0 // pred_region
    _
  $region17: #{_lambda_.9} parent=0 // pred_fallthru
    _
  // Predicated region
  $region18: #{_lambda_.9} parent=0 // pred_check
    _
  $region19: #{_lambda_.9} parent=0 // pred_check_branch
    %323 = sbr.rel (0) target = $region21
  $region20: #{_lambda_.9} parent=0 // pred_region
    _
  $region21: #{_lambda_.9} parent=0 // pred_fallthru
    _
  // Predicated region
  $region22: #{_lambda_.9} parent=0 // pred_check
    _
  $region23: #{_lambda_.9} parent=0 // pred_check_branch
    %325 = sbr.rel (0) target = $region25
  $region24: #{_lambda_.9} parent=0 // pred_region
    _
  $region25: #{_lambda_.9} parent=0 // pred_fallthru
    _

// kernel: _lambda_.10
$region0: #{_lambda_.10}
  #allocation0 [shape = 'u32[]', space=smem, size = 0x4, offset = 0x4, fixed_abs, tag = 'smem constant byte address 0x4 - core index']
  #allocation1 [shape = 'u32[144,128]{1,0:T(1,128)}', space=vmem, size = 0x12000, scoped, tag = 'internal scratch']
  %s0 = inlined_call_operand.vmem [shape: f32[128,128], index: 0, kind: input, shape index: {}]
  %s1 = inlined_call_operand.vmem [shape: f32[1,128], index: 1, kind: input, shape index: {}]
  %s2 = inlined_call_operand.vmem [shape: f32[1,128], index: 2, kind: input, shape index: {}]
  %s3 = inlined_call_operand.vmem [shape: f32[128,128], index: 3, kind: output, shape index: {}]
  %s4 = sld [smem:[#allocation0]]
  $region22: #{_lambda_.10} parent=0
    _
  %s6 = ssub.s32 1, %s4
  %s7 = scalar_select 0, %s6, %s4
  // Predicated region
  $region2: #{_lambda_.10} parent=0 // pred_check
    _
  $region3: #{_lambda_.10} parent=0 // pred_check_branch
    %9 = sbr.rel (0) target = $region5
  $region4: #{_lambda_.10} parent=0 // pred_region
    _
  $region5: #{_lambda_.10} parent=0 // pred_fallthru
    _
  // Predicated region
  $region6: #{_lambda_.10} parent=0 // pred_check
    _
  $region7: #{_lambda_.10} parent=0 // pred_check_branch
    %11 = sbr.rel (0) target = $region9
  $region8: #{_lambda_.10} parent=0 // pred_region
    _
  $region9: #{_lambda_.10} parent=0 // pred_fallthru
    _
  // Predicated region
  $region10: #{_lambda_.10} parent=0 // pred_check
    _
  $region11: #{_lambda_.10} parent=0 // pred_check_branch
    %13 = sbr.rel (0) target = $region13
  $region12: #{_lambda_.10} parent=0 // pred_region
    _
  $region13: #{_lambda_.10} parent=0 // pred_fallthru
    _
  %v14 = vld [vmem:[%s0] sm:$0xff]
  %v15 = vld [vmem:[%s0 + $0x8] sm:$0xff]
  %v16 = vld [vmem:[%s0 + $0x10] sm:$0xff]
  %v17 = vld [vmem:[%s0 + $0x18] sm:$0xff]
  %v18 = vld [vmem:[%s0 + $0x20] sm:$0xff]
  %v19 = vld [vmem:[%s0 + $0x28] sm:$0xff]
  %v20 = vld [vmem:[%s0 + $0x30] sm:$0xff]
  %v21 = vld [vmem:[%s0 + $0x38] sm:$0xff]
  %v22 = vld [vmem:[%s0 + $0x40] sm:$0xff]
  %v23 = vld [vmem:[%s0 + $0x48] sm:$0xff]
  %v24 = vld [vmem:[%s0 + $0x50] sm:$0xff]
  %v25 = vld [vmem:[%s0 + $0x58] sm:$0xff]
  %v26 = vld [vmem:[%s0 + $0x60] sm:$0xff]
  %v27 = vld [vmem:[%s0 + $0x68] sm:$0xff]
  %v28 = vld [vmem:[%s0 + $0x70] sm:$0xff]
  %v29 = vld [vmem:[%s0 + $0x78] sm:$0xff]
  %v30 = vld [vmem:[%s1] sm:$0x1]
  %v32 = vlaneseq
  %v33 = vshrl.u32 %v32, 7
  %v34 = vsub.s32 0, %v33
  %v35 = vrot.slane %v30, %v34
  %v37 = vmul.f32 %v14, %v35
  %v38 = vmul.f32 %v15, %v35
  %v39 = vmul.f32 %v16, %v35
  %v40 = vmul.f32 %v17, %v35
  %v41 = vmul.f32 %v18, %v35
  %v42 = vmul.f32 %v19, %v35
  %v43 = vmul.f32 %v20, %v35
  %v44 = vmul.f32 %v21, %v35
  %v45 = vmul.f32 %v22, %v35
  %v46 = vmul.f32 %v23, %v35
  %v47 = vmul.f32 %v24, %v35
  %v48 = vmul.f32 %v25, %v35
  %v49 = vmul.f32 %v26, %v35
  %v50 = vmul.f32 %v27, %v35
  %v51 = vmul.f32 %v28, %v35
  %v52 = vmul.f32 %v29, %v35
  %v53 = vld [vmem:[%s2] sm:$0x1]
  %v55 = vlaneseq
  %v56 = vshrl.u32 %v55, 7
  %v57 = vsub.s32 0, %v56
  %v58 = vrot.slane %v53, %v57
  %v60 = vadd.f32 %v37, %v58
  %v61 = vadd.f32 %v38, %v58
  %v62 = vadd.f32 %v39, %v58
  %v63 = vadd.f32 %v40, %v58
  %v64 = vadd.f32 %v41, %v58
  %v65 = vadd.f32 %v42, %v58
  %v66 = vadd.f32 %v43, %v58
  %v67 = vadd.f32 %v44, %v58
  %v68 = vadd.f32 %v45, %v58
  %v69 = vadd.f32 %v46, %v58
  %v70 = vadd.f32 %v47, %v58
  %v71 = vadd.f32 %v48, %v58
  %v72 = vadd.f32 %v49, %v58
  %v73 = vadd.f32 %v50, %v58
  %v74 = vadd.f32 %v51, %v58
  %v75 = vadd.f32 %v52, %v58
  %v76 = vmul.f32 %v60, 0.2
  %v77 = vmul.f32 %v61, 0.2
  %v78 = vmul.f32 %v62, 0.2
  %v79 = vmul.f32 %v63, 0.2
  %v80 = vmul.f32 %v64, 0.2
  %v81 = vmul.f32 %v65, 0.2
  %v82 = vmul.f32 %v66, 0.2
  %v83 = vmul.f32 %v67, 0.2
  %v84 = vmul.f32 %v68, 0.2
  %v85 = vmul.f32 %v69, 0.2
  %v86 = vmul.f32 %v70, 0.2
  %v87 = vmul.f32 %v71, 0.2
  %v88 = vmul.f32 %v72, 0.2
  %v89 = vmul.f32 %v73, 0.2
  %v90 = vmul.f32 %v74, 0.2
  %v91 = vmul.f32 %v75, 0.2
  %v92 = vmax.f32 %v60, %v76
  %v93 = vmax.f32 %v61, %v77
  %v94 = vmax.f32 %v62, %v78
  %v95 = vmax.f32 %v63, %v79
  %v96 = vmax.f32 %v64, %v80
  %v97 = vmax.f32 %v65, %v81
  %v98 = vmax.f32 %v66, %v82
  %v99 = vmax.f32 %v67, %v83
  %v100 = vmax.f32 %v68, %v84
  %v101 = vmax.f32 %v69, %v85
  %v102 = vmax.f32 %v70, %v86
  %v103 = vmax.f32 %v71, %v87
  %v104 = vmax.f32 %v72, %v88
  %v105 = vmax.f32 %v73, %v89
  %v106 = vmax.f32 %v74, %v90
  %v107 = vmax.f32 %v75, %v91
  %108 = vst [vmem:[%s3] sm:$0xff] %v92
  %109 = vst [vmem:[%s3 + $0x8] sm:$0xff] %v93
  %110 = vst [vmem:[%s3 + $0x10] sm:$0xff] %v94
  %111 = vst [vmem:[%s3 + $0x18] sm:$0xff] %v95
  %112 = vst [vmem:[%s3 + $0x20] sm:$0xff] %v96
  %113 = vst [vmem:[%s3 + $0x28] sm:$0xff] %v97
  %114 = vst [vmem:[%s3 + $0x30] sm:$0xff] %v98
  %115 = vst [vmem:[%s3 + $0x38] sm:$0xff] %v99
  %116 = vst [vmem:[%s3 + $0x40] sm:$0xff] %v100
  %117 = vst [vmem:[%s3 + $0x48] sm:$0xff] %v101
  %118 = vst [vmem:[%s3 + $0x50] sm:$0xff] %v102
  %119 = vst [vmem:[%s3 + $0x58] sm:$0xff] %v103
  %120 = vst [vmem:[%s3 + $0x60] sm:$0xff] %v104
  %121 = vst [vmem:[%s3 + $0x68] sm:$0xff] %v105
  %122 = vst [vmem:[%s3 + $0x70] sm:$0xff] %v106
  %123 = vst [vmem:[%s3 + $0x78] sm:$0xff] %v107
  // Predicated region
  $region14: #{_lambda_.10} parent=0 // pred_check
    _
  $region15: #{_lambda_.10} parent=0 // pred_check_branch
    %125 = sbr.rel (0) target = $region17
  $region16: #{_lambda_.10} parent=0 // pred_region
    _
  $region17: #{_lambda_.10} parent=0 // pred_fallthru
    _
  // Predicated region
  $region18: #{_lambda_.10} parent=0 // pred_check
    _
  $region19: #{_lambda_.10} parent=0 // pred_check_branch
    %127 = sbr.rel (0) target = $region21
  $region20: #{_lambda_.10} parent=0 // pred_region
    _
  $region21: #{_lambda_.10} parent=0 // pred_fallthru
    _

// kernel: _lambda_.11
$region0: #{_lambda_.11}
  #allocation0 [shape = 'u32[]', space=smem, size = 0x4, offset = 0x4, fixed_abs, tag = 'smem constant byte address 0x4 - core index']
  #allocation1 [shape = 'u32[144,128]{1,0:T(1,128)}', space=vmem, size = 0x12000, scoped, tag = 'internal scratch']
  %s0 = inlined_call_operand.vmem [shape: bf16[32,256], index: 0, kind: input, shape index: {}]
  %s1 = inlined_call_operand.vmem [shape: bf16[256,128], index: 1, kind: input, shape index: {}]
  %s2 = inlined_call_operand.vmem [shape: f32[32,128], index: 2, kind: output, shape index: {0}]
  %s3 = inlined_call_operand.vmem [shape: f32[8,128], index: 3, kind: output, shape index: {1}]
  %4 = xla_tuple %s2, %s3
  %s5 = sld [smem:[#allocation0]]
  $region26: #{_lambda_.11} parent=0
    _
  %s7 = ssub.s32 1, %s5
  %s8 = scalar_select 0, %s7, %s5
  // Predicated region
  $region2: #{_lambda_.11} parent=0 // pred_check
    _
  $region3: #{_lambda_.11} parent=0 // pred_check_branch
    %10 = sbr.rel (0) target = $region5
  $region4: #{_lambda_.11} parent=0 // pred_region
    _
  $region5: #{_lambda_.11} parent=0 // pred_fallthru
    _
  // Predicated region
  $region6: #{_lambda_.11} parent=0 // pred_check
    _
  $region7: #{_lambda_.11} parent=0 // pred_check_branch
    %12 = sbr.rel (0) target = $region9
  $region8: #{_lambda_.11} parent=0 // pred_region
    _
  $region9: #{_lambda_.11} parent=0 // pred_fallthru
    _
  %v14 = vld [vmem:[%s0] sm:$0xff]
  %v15 = vld [vmem:[%s0 + $0x8] sm:$0xff]
  %v16 = vld [vmem:[%s0 + $0x10] sm:$0xff]
  %v17 = vld [vmem:[%s0 + $0x18] sm:$0xff]
  %v18 = vld [vmem:[%s1] sm:$0xf]
  %v19 = vld [vmem:[%s1 + $0x4] sm:$0xf]
  %v20 = vld [vmem:[%s1 + $0x8] sm:$0xf]
  %v21 = vld [vmem:[%s1 + $0xc] sm:$0xf]
  %v22 = vld [vmem:[%s1 + $0x10] sm:$0xf]
  %v23 = vld [vmem:[%s1 + $0x14] sm:$0xf]
  %v24 = vld [vmem:[%s1 + $0x18] sm:$0xf]
  %v25 = vld [vmem:[%s1 + $0x1c] sm:$0xf]
  %v26 = vld [vmem:[%s1 + $0x20] sm:$0xf]
  %v27 = vld [vmem:[%s1 + $0x24] sm:$0xf]
  %v28 = vld [vmem:[%s1 + $0x28] sm:$0xf]
  %v29 = vld [vmem:[%s1 + $0x2c] sm:$0xf]
  %v30 = vld [vmem:[%s1 + $0x30] sm:$0xf]
  %v31 = vld [vmem:[%s1 + $0x34] sm:$0xf]
  %v32 = vld [vmem:[%s1 + $0x38] sm:$0xf]
  %v33 = vld [vmem:[%s1 + $0x3c] sm:$0xf]
  %v34 = vld [vmem:[%s1 + $0x40] sm:$0xf]
  %v35 = vld [vmem:[%s1 + $0x44] sm:$0xf]
  %v36 = vld [vmem:[%s1 + $0x48] sm:$0xf]
  %v37 = vld [vmem:[%s1 + $0x4c] sm:$0xf]
  %v38 = vld [vmem:[%s1 + $0x50] sm:$0xf]
  %v39 = vld [vmem:[%s1 + $0x54] sm:$0xf]
  %v40 = vld [vmem:[%s1 + $0x58] sm:$0xf]
  %v41 = vld [vmem:[%s1 + $0x5c] sm:$0xf]
  %v42 = vld [vmem:[%s1 + $0x60] sm:$0xf]
  %v43 = vld [vmem:[%s1 + $0x64] sm:$0xf]
  %v44 = vld [vmem:[%s1 + $0x68] sm:$0xf]
  %v45 = vld [vmem:[%s1 + $0x6c] sm:$0xf]
  %v46 = vld [vmem:[%s1 + $0x70] sm:$0xf]
  %v47 = vld [vmem:[%s1 + $0x74] sm:$0xf]
  %v48 = vld [vmem:[%s1 + $0x78] sm:$0xf]
  %v49 = vld [vmem:[%s1 + $0x7c] sm:$0xf]
  %v54 = vunpack.c.l.b16 %v14
  %v55 = vunpack.c.h.b16 %v14
  %v56 = vunpack.c.l.b16 %v15
  %v57 = vunpack.c.h.b16 %v15
  %v58 = vunpack.c.l.b16 %v16
  %v59 = vunpack.c.h.b16 %v16
  %v60 = vunpack.c.l.b16 %v17
  %v61 = vunpack.c.h.b16 %v17
  %v62 = vpack.c.b16 %v56, %v54
  %v63 = vpack.c.b16 %v57, %v55
  %v64 = vpack.c.b16 %v60, %v58
  %v65 = vpack.c.b16 %v61, %v59
  %v102 = vunpack.c.l.b16 %v18
  %v103 = vunpack.c.l.b16 %v19
  %v104 = vunpack.c.l.b16 %v20
  %v105 = vunpack.c.l.b16 %v21
  %v106 = vunpack.c.l.b16 %v22
  %v107 = vunpack.c.l.b16 %v23
  %v108 = vunpack.c.l.b16 %v24
  %v109 = vunpack.c.l.b16 %v25
  %v110 = vunpack.c.l.b16 %v26
  %v111 = vunpack.c.l.b16 %v27
  %v112 = vunpack.c.l.b16 %v28
  %v113 = vunpack.c.l.b16 %v29
  %v114 = vunpack.c.l.b16 %v30
  %v115 = vunpack.c.l.b16 %v31
  %v116 = vunpack.c.l.b16 %v32
  %v117 = vunpack.c.l.b16 %v33
  %v118 = vunpack.c.l.b16 %v34
  %v119 = vunpack.c.l.b16 %v35
  %v120 = vunpack.c.l.b16 %v36
  %v121 = vunpack.c.l.b16 %v37
  %v122 = vunpack.c.l.b16 %v38
  %v123 = vunpack.c.l.b16 %v39
  %v124 = vunpack.c.l.b16 %v40
  %v125 = vunpack.c.l.b16 %v41
  %v126 = vunpack.c.l.b16 %v42
  %v127 = vunpack.c.l.b16 %v43
  %v128 = vunpack.c.l.b16 %v44
  %v129 = vunpack.c.l.b16 %v45
  %v130 = vunpack.c.l.b16 %v46
  %v131 = vunpack.c.l.b16 %v47
  %v132 = vunpack.c.l.b16 %v48
  %v133 = vunpack.c.l.b16 %v49
  %v134 = vpack.c.b16 %v103, %v102
  %v135 = vpack.c.b16 %v105, %v104
  %v136 = vpack.c.b16 %v107, %v106
  %v137 = vpack.c.b16 %v109, %v108
  %v138 = vpack.c.b16 %v111, %v110
  %v139 = vpack.c.b16 %v113, %v112
  %v140 = vpack.c.b16 %v115, %v114
  %v141 = vpack.c.b16 %v117, %v116
  %v142 = vpack.c.b16 %v119, %v118
  %v143 = vpack.c.b16 %v121, %v120
  %v144 = vpack.c.b16 %v123, %v122
  %v145 = vpack.c.b16 %v125, %v124
  %v146 = vpack.c.b16 %v127, %v126
  %v147 = vpack.c.b16 %v129, %v128
  %v148 = vpack.c.b16 %v131, %v130
  %v149 = vpack.c.b16 %v133, %v132
  %166 = vmatprep.subr.bf16.mxu0 0
  %167 = vmatpush1.bf16.msra.mxu0 %v141
  %168 = vmatprep.subr.bf16.mxu0 0
  %169 = vmatpush1.bf16.msra.mxu0 %v140
  %170 = vmatprep.subr.bf16.mxu0 0
  %171 = vmatpush1.bf16.msra.mxu0 %v139
  %172 = vmatprep.subr.bf16.mxu0 0
  %173 = vmatpush1.bf16.msra.mxu0 %v138
  %174 = vmatprep.subr.bf16.mxu0 0
  %175 = vmatpush1.bf16.msra.mxu0 %v137
  %176 = vmatprep.subr.bf16.mxu0 0
  %177 = vmatpush1.bf16.msra.mxu0 %v136
  %178 = vmatprep.subr.bf16.mxu0 0
  %179 = vmatpush1.bf16.msra.mxu0 %v135
  %180 = vmatprep.subr.bf16.mxu0 0
  %181 = vmatpush1.bf16.msra.mxu0 %v134
  %182 = vmatprep.subr.bf16.mxu0 0
  %183 = vmatpush2.bf16.msra.mxu0 %v149
  %184 = vmatprep.subr.bf16.mxu0 0
  %185 = vmatpush2.bf16.msra.mxu0 %v148
  %186 = vmatprep.subr.bf16.mxu0 0
  %187 = vmatpush2.bf16.msra.mxu0 %v147
  %188 = vmatprep.subr.bf16.mxu0 0
  %189 = vmatpush2.bf16.msra.mxu0 %v146
  %190 = vmatprep.subr.bf16.mxu0 0
  %191 = vmatpush2.bf16.msra.mxu0 %v145
  %192 = vmatprep.subr.bf16.mxu0 0
  %193 = vmatpush2.bf16.msra.mxu0 %v144
  %194 = vmatprep.subr.bf16.mxu0 0
  %195 = vmatpush2.bf16.msra.mxu0 %v143
  %196 = vmatprep.subr.bf16.mxu0 0
  %197 = vmatpush2.bf16.msra.mxu0 %v142
  %198 = vmatprep.mubr.bf16.mxu0 %v63
  %199 = vmatmul.mubr.bf16.gmra.mxu0 %v62
  %v200 = vpop.f32.mrf.mxu0
  %v201 = vadd.f32 0.0, %v200
  %v202 = vpop.f32.mrf.mxu0
  %v203 = vpop.f32.mrf.mxu0
  %v204 = vadd.f32 0.0, %v203
  %v205 = vpop.f32.mrf.mxu0
  %206 = vmatprep.mubr.bf16.mxu0 %v65
  %207 = vmatmul.mubr.bf16.gmra.mxu0 %v64
  %v208 = vpop.f32.mrf.mxu0
  %v209 = vadd.f32 0.0, %v208
  %v210 = vpop.f32.mrf.mxu0
  %v211 = vpop.f32.mrf.mxu0
  %v212 = vadd.f32 0.0, %v211
  %v213 = vpop.f32.mrf.mxu0
  %214 = vdwg.mxu0
  %215 = vst [vmem:[%s2] sm:$0xff] %v201
  %216 = vst [vmem:[%s2 + $0x8] sm:$0xff] %v204
  %217 = vst [vmem:[%s2 + $0x10] sm:$0xff] %v209
  %218 = vst [vmem:[%s2 + $0x18] sm:$0xff] %v212
  %v219 = vadd.f32 %v201, %v204
  %v220 = vadd.f32 %v219, %v209
  %v221 = vadd.f32 %v220, %v212
  %v222 = vrot.slane %v221, 4
  %v223 = vadd.f32 %v221, %v222
  %v224 = vrot.slane %v223, 2
  %v225 = vadd.f32 %v223, %v224
  %v226 = vrot.slane %v225, 1
  %v227 = vadd.f32 %v225, %v226
  %v228 = vmul.f32 %v201, %v201
  %v229 = vmul.f32 %v204, %v204
  %v230 = vmul.f32 %v209, %v209
  %v231 = vmul.f32 %v212, %v212
  %v232 = vadd.f32 %v228, %v229
  %v233 = vadd.f32 %v232, %v230
  %v234 = vadd.f32 %v233, %v231
  %v235 = vrot.slane %v234, 4
  %v236 = vadd.f32 %v234, %v235
  %v237 = vrot.slane %v236, 2
  %v238 = vadd.f32 %v236, %v237
  %v239 = vrot.slane %v238, 1
  %v240 = vadd.f32 %v238, %v239
  %vm241 = vcmask 1040384
  %v242 = vsel %vm241, %v227, %v240
  %vm243 = vcmask 1041408
  %v244 = vsel %vm243, %v242, 0.0
  %245 = vst [vmem:[%s3] sm:$0xff] %v244
  // Predicated region
  $region10: #{_lambda_.11} parent=0 // pred_check
    _
  $region11: #{_lambda_.11} parent=0 // pred_check_branch
    %247 = sbr.rel (0) target = $region13
  $region12: #{_lambda_.11} parent=0 // pred_region
    _
  $region13: #{_lambda_.11} parent=0 // pred_fallthru
    _
  // Predicated region
  $region14: #{_lambda_.11} parent=0 // pred_check
    _
  $region15: #{_lambda_.11} parent=0 // pred_check_branch
    %249 = sbr.rel (0) target = $region17
  $region16: #{_lambda_.11} parent=0 // pred_region
    _
  $region17: #{_lambda_.11} parent=0 // pred_fallthru
    _
  // Predicated region
  $region18: #{_lambda_.11} parent=0 // pred_check
    _
  $region19: #{_lambda_.11} parent=0 // pred_check_branch
    %251 = sbr.rel (0) target = $region21
  $region20: #{_lambda_.11} parent=0 // pred_region
    _
  $region21: #{_lambda_.11} parent=0 // pred_fallthru
    _
  // Predicated region
  $region22: #{_lambda_.11} parent=0 // pred_check
    _
  $region23: #{_lambda_.11} parent=0 // pred_check_branch
    %253 = sbr.rel (0) target = $region25
  $region24: #{_lambda_.11} parent=0 // pred_region
    _
  $region25: #{_lambda_.11} parent=0 // pred_fallthru
    _

// kernel: _lambda_.12
$region0: #{_lambda_.12}
  #allocation0 [shape = 'u32[]', space=smem, size = 0x4, offset = 0x4, fixed_abs, tag = 'smem constant byte address 0x4 - core index']
  #allocation1 [shape = 'u32[144,128]{1,0:T(1,128)}', space=vmem, size = 0x12000, scoped, tag = 'internal scratch']
  %s0 = inlined_call_operand.vmem [shape: f32[32,128], index: 0, kind: input, shape index: {}]
  %s1 = inlined_call_operand.vmem [shape: f32[1,128], index: 1, kind: input, shape index: {}]
  %s2 = inlined_call_operand.vmem [shape: f32[1,128], index: 2, kind: input, shape index: {}]
  %s3 = inlined_call_operand.vmem [shape: f32[32,128], index: 3, kind: output, shape index: {}]
  %s4 = sld [smem:[#allocation0]]
  $region22: #{_lambda_.12} parent=0
    _
  %s6 = ssub.s32 1, %s4
  %s7 = scalar_select 0, %s6, %s4
  // Predicated region
  $region2: #{_lambda_.12} parent=0 // pred_check
    _
  $region3: #{_lambda_.12} parent=0 // pred_check_branch
    %9 = sbr.rel (0) target = $region5
  $region4: #{_lambda_.12} parent=0 // pred_region
    _
  $region5: #{_lambda_.12} parent=0 // pred_fallthru
    _
  // Predicated region
  $region6: #{_lambda_.12} parent=0 // pred_check
    _
  $region7: #{_lambda_.12} parent=0 // pred_check_branch
    %11 = sbr.rel (0) target = $region9
  $region8: #{_lambda_.12} parent=0 // pred_region
    _
  $region9: #{_lambda_.12} parent=0 // pred_fallthru
    _
  // Predicated region
  $region10: #{_lambda_.12} parent=0 // pred_check
    _
  $region11: #{_lambda_.12} parent=0 // pred_check_branch
    %13 = sbr.rel (0) target = $region13
  $region12: #{_lambda_.12} parent=0 // pred_region
    _
  $region13: #{_lambda_.12} parent=0 // pred_fallthru
    _
  %v14 = vld [vmem:[%s0] sm:$0xff]
  %v15 = vld [vmem:[%s0 + $0x8] sm:$0xff]
  %v16 = vld [vmem:[%s0 + $0x10] sm:$0xff]
  %v17 = vld [vmem:[%s0 + $0x18] sm:$0xff]
  %v18 = vld [vmem:[%s1] sm:$0x1]
  %v20 = vlaneseq
  %v21 = vshrl.u32 %v20, 7
  %v22 = vsub.s32 0, %v21
  %v23 = vrot.slane %v18, %v22
  %v25 = vmul.f32 %v14, %v23
  %v26 = vmul.f32 %v15, %v23
  %v27 = vmul.f32 %v16, %v23
  %v28 = vmul.f32 %v17, %v23
  %v29 = vld [vmem:[%s2] sm:$0x1]
  %v31 = vlaneseq
  %v32 = vshrl.u32 %v31, 7
  %v33 = vsub.s32 0, %v32
  %v34 = vrot.slane %v29, %v33
  %v36 = vadd.f32 %v25, %v34
  %v37 = vadd.f32 %v26, %v34
  %v38 = vadd.f32 %v27, %v34
  %v39 = vadd.f32 %v28, %v34
  %v40 = vmul.f32 %v36, 0.2
  %v41 = vmul.f32 %v37, 0.2
  %v42 = vmul.f32 %v38, 0.2
  %v43 = vmul.f32 %v39, 0.2
  %v44 = vmax.f32 %v36, %v40
  %v45 = vmax.f32 %v37, %v41
  %v46 = vmax.f32 %v38, %v42
  %v47 = vmax.f32 %v39, %v43
  %48 = vst [vmem:[%s3] sm:$0xff] %v44
  %49 = vst [vmem:[%s3 + $0x8] sm:$0xff] %v45
  %50 = vst [vmem:[%s3 + $0x10] sm:$0xff] %v46
  %51 = vst [vmem:[%s3 + $0x18] sm:$0xff] %v47
  // Predicated region
  $region14: #{_lambda_.12} parent=0 // pred_check
    _
  $region15: #{_lambda_.12} parent=0 // pred_check_branch
    %53 = sbr.rel (0) target = $region17
  $region16: #{_lambda_.12} parent=0 // pred_region
    _
  $region17: #{_lambda_.12} parent=0 // pred_fallthru
    _
  // Predicated region
  $region18: #{_lambda_.12} parent=0 // pred_check
    _
  $region19: #{_lambda_.12} parent=0 // pred_check_branch
    %55 = sbr.rel (0) target = $region21
  $region20: #{_lambda_.12} parent=0 // pred_region
    _
  $region21: #{_lambda_.12} parent=0 // pred_fallthru
    _

// kernel: _lambda_.13
$region0: #{_lambda_.13}
  #allocation0 [shape = 'u32[]', space=smem, size = 0x4, offset = 0x4, fixed_abs, tag = 'smem constant byte address 0x4 - core index']
  #allocation1 [shape = 'u32[144,128]{1,0:T(1,128)}', space=vmem, size = 0x12000, scoped, tag = 'internal scratch']
  %s0 = inlined_call_operand.vmem [shape: bf16[32,512], index: 0, kind: input, shape index: {}]
  %s1 = inlined_call_operand.vmem [shape: bf16[512,128], index: 1, kind: input, shape index: {}]
  %s2 = inlined_call_operand.vmem [shape: f32[32,128], index: 2, kind: output, shape index: {0}]
  %s3 = inlined_call_operand.vmem [shape: f32[8,128], index: 3, kind: output, shape index: {1}]
  %4 = xla_tuple %s2, %s3
  %s5 = sld [smem:[#allocation0]]
  $region26: #{_lambda_.13} parent=0
    _
  %s7 = ssub.s32 1, %s5
  %s8 = scalar_select 0, %s7, %s5
  // Predicated region
  $region2: #{_lambda_.13} parent=0 // pred_check
    _
  $region3: #{_lambda_.13} parent=0 // pred_check_branch
    %10 = sbr.rel (0) target = $region5
  $region4: #{_lambda_.13} parent=0 // pred_region
    _
  $region5: #{_lambda_.13} parent=0 // pred_fallthru
    _
  // Predicated region
  $region6: #{_lambda_.13} parent=0 // pred_check
    _
  $region7: #{_lambda_.13} parent=0 // pred_check_branch
    %12 = sbr.rel (0) target = $region9
  $region8: #{_lambda_.13} parent=0 // pred_region
    _
  $region9: #{_lambda_.13} parent=0 // pred_fallthru
    _
  %v14 = vld [vmem:[%s0] sm:$0xff]
  %v15 = vld [vmem:[%s0 + $0x8] sm:$0xff]
  %v16 = vld [vmem:[%s0 + $0x10] sm:$0xff]
  %v17 = vld [vmem:[%s0 + $0x18] sm:$0xff]
  %v18 = vld [vmem:[%s0 + $0x20] sm:$0xff]
  %v19 = vld [vmem:[%s0 + $0x28] sm:$0xff]
  %v20 = vld [vmem:[%s0 + $0x30] sm:$0xff]
  %v21 = vld [vmem:[%s0 + $0x38] sm:$0xff]
  %v22 = vld [vmem:[%s1] sm:$0xf]
  %v23 = vld [vmem:[%s1 + $0x4] sm:$0xf]
  %v24 = vld [vmem:[%s1 + $0x8] sm:$0xf]
  %v25 = vld [vmem:[%s1 + $0xc] sm:$0xf]
  %v26 = vld [vmem:[%s1 + $0x10] sm:$0xf]
  %v27 = vld [vmem:[%s1 + $0x14] sm:$0xf]
  %v28 = vld [vmem:[%s1 + $0x18] sm:$0xf]
  %v29 = vld [vmem:[%s1 + $0x1c] sm:$0xf]
  %v30 = vld [vmem:[%s1 + $0x20] sm:$0xf]
  %v31 = vld [vmem:[%s1 + $0x24] sm:$0xf]
  %v32 = vld [vmem:[%s1 + $0x28] sm:$0xf]
  %v33 = vld [vmem:[%s1 + $0x2c] sm:$0xf]
  %v34 = vld [vmem:[%s1 + $0x30] sm:$0xf]
  %v35 = vld [vmem:[%s1 + $0x34] sm:$0xf]
  %v36 = vld [vmem:[%s1 + $0x38] sm:$0xf]
  %v37 = vld [vmem:[%s1 + $0x3c] sm:$0xf]
  %v38 = vld [vmem:[%s1 + $0x40] sm:$0xf]
  %v39 = vld [vmem:[%s1 + $0x44] sm:$0xf]
  %v40 = vld [vmem:[%s1 + $0x48] sm:$0xf]
  %v41 = vld [vmem:[%s1 + $0x4c] sm:$0xf]
  %v42 = vld [vmem:[%s1 + $0x50] sm:$0xf]
  %v43 = vld [vmem:[%s1 + $0x54] sm:$0xf]
  %v44 = vld [vmem:[%s1 + $0x58] sm:$0xf]
  %v45 = vld [vmem:[%s1 + $0x5c] sm:$0xf]
  %v46 = vld [vmem:[%s1 + $0x60] sm:$0xf]
  %v47 = vld [vmem:[%s1 + $0x64] sm:$0xf]
  %v48 = vld [vmem:[%s1 + $0x68] sm:$0xf]
  %v49 = vld [vmem:[%s1 + $0x6c] sm:$0xf]
  %v50 = vld [vmem:[%s1 + $0x70] sm:$0xf]
  %v51 = vld [vmem:[%s1 + $0x74] sm:$0xf]
  %v52 = vld [vmem:[%s1 + $0x78] sm:$0xf]
  %v53 = vld [vmem:[%s1 + $0x7c] sm:$0xf]
  %v54 = vld [vmem:[%s1 + $0x80] sm:$0xf]
  %v55 = vld [vmem:[%s1 + $0x84] sm:$0xf]
  %v56 = vld [vmem:[%s1 + $0x88] sm:$0xf]
  %v57 = vld [vmem:[%s1 + $0x8c] sm:$0xf]
  %v58 = vld [vmem:[%s1 + $0x90] sm:$0xf]
  %v59 = vld [vmem:[%s1 + $0x94] sm:$0xf]
  %v60 = vld [vmem:[%s1 + $0x98] sm:$0xf]
  %v61 = vld [vmem:[%s1 + $0x9c] sm:$0xf]
  %v62 = vld [vmem:[%s1 + $0xa0] sm:$0xf]
  %v63 = vld [vmem:[%s1 + $0xa4] sm:$0xf]
  %v64 = vld [vmem:[%s1 + $0xa8] sm:$0xf]
  %v65 = vld [vmem:[%s1 + $0xac] sm:$0xf]
  %v66 = vld [vmem:[%s1 + $0xb0] sm:$0xf]
  %v67 = vld [vmem:[%s1 + $0xb4] sm:$0xf]
  %v68 = vld [vmem:[%s1 + $0xb8] sm:$0xf]
  %v69 = vld [vmem:[%s1 + $0xbc] sm:$0xf]
  %v70 = vld [vmem:[%s1 + $0xc0] sm:$0xf]
  %v71 = vld [vmem:[%s1 + $0xc4] sm:$0xf]
  %v72 = vld [vmem:[%s1 + $0xc8] sm:$0xf]
  %v73 = vld [vmem:[%s1 + $0xcc] sm:$0xf]
  %v74 = vld [vmem:[%s1 + $0xd0] sm:$0xf]
  %v75 = vld [vmem:[%s1 + $0xd4] sm:$0xf]
  %v76 = vld [vmem:[%s1 + $0xd8] sm:$0xf]
  %v77 = vld [vmem:[%s1 + $0xdc] sm:$0xf]
  %v78 = vld [vmem:[%s1 + $0xe0] sm:$0xf]
  %v79 = vld [vmem:[%s1 + $0xe4] sm:$0xf]
  %v80 = vld [vmem:[%s1 + $0xe8] sm:$0xf]
  %v81 = vld [vmem:[%s1 + $0xec] sm:$0xf]
  %v82 = vld [vmem:[%s1 + $0xf0] sm:$0xf]
  %v83 = vld [vmem:[%s1 + $0xf4] sm:$0xf]
  %v84 = vld [vmem:[%s1 + $0xf8] sm:$0xf]
  %v85 = vld [vmem:[%s1 + $0xfc] sm:$0xf]
  %v94 = vunpack.c.l.b16 %v14
  %v95 = vunpack.c.h.b16 %v14
  %v96 = vunpack.c.l.b16 %v15
  %v97 = vunpack.c.h.b16 %v15
  %v98 = vunpack.c.l.b16 %v16
  %v99 = vunpack.c.h.b16 %v16
  %v100 = vunpack.c.l.b16 %v17
  %v101 = vunpack.c.h.b16 %v17
  %v102 = vunpack.c.l.b16 %v18
  %v103 = vunpack.c.h.b16 %v18
  %v104 = vunpack.c.l.b16 %v19
  %v105 = vunpack.c.h.b16 %v19
  %v106 = vunpack.c.l.b16 %v20
  %v107 = vunpack.c.h.b16 %v20
  %v108 = vunpack.c.l.b16 %v21
  %v109 = vunpack.c.h.b16 %v21
  %v110 = vpack.c.b16 %v98, %v94
  %v111 = vpack.c.b16 %v99, %v95
  %v112 = vpack.c.b16 %v100, %v96
  %v113 = vpack.c.b16 %v101, %v97
  %v114 = vpack.c.b16 %v106, %v102
  %v115 = vpack.c.b16 %v107, %v103
  %v116 = vpack.c.b16 %v108, %v104
  %v117 = vpack.c.b16 %v109, %v105
  %v190 = vunpack.c.l.b16 %v22
  %v191 = vunpack.c.l.b16 %v23
  %v192 = vunpack.c.l.b16 %v24
  %v193 = vunpack.c.l.b16 %v25
  %v194 = vunpack.c.l.b16 %v26
  %v195 = vunpack.c.l.b16 %v27
  %v196 = vunpack.c.l.b16 %v28
  %v197 = vunpack.c.l.b16 %v29
  %v198 = vunpack.c.l.b16 %v30
  %v199 = vunpack.c.l.b16 %v31
  %v200 = vunpack.c.l.b16 %v32
  %v201 = vunpack.c.l.b16 %v33
  %v202 = vunpack.c.l.b16 %v34
  %v203 = vunpack.c.l.b16 %v35
  %v204 = vunpack.c.l.b16 %v36
  %v205 = vunpack.c.l.b16 %v37
  %v206 = vunpack.c.l.b16 %v38
  %v207 = vunpack.c.l.b16 %v39
  %v208 = vunpack.c.l.b16 %v40
  %v209 = vunpack.c.l.b16 %v41
  %v210 = vunpack.c.l.b16 %v42
  %v211 = vunpack.c.l.b16 %v43
  %v212 = vunpack.c.l.b16 %v44
  %v213 = vunpack.c.l.b16 %v45
  %v214 = vunpack.c.l.b16 %v46
  %v215 = vunpack.c.l.b16 %v47
  %v216 = vunpack.c.l.b16 %v48
  %v217 = vunpack.c.l.b16 %v49
  %v218 = vunpack.c.l.b16 %v50
  %v219 = vunpack.c.l.b16 %v51
  %v220 = vunpack.c.l.b16 %v52
  %v221 = vunpack.c.l.b16 %v53
  %v222 = vunpack.c.l.b16 %v54
  %v223 = vunpack.c.l.b16 %v55
  %v224 = vunpack.c.l.b16 %v56
  %v225 = vunpack.c.l.b16 %v57
  %v226 = vunpack.c.l.b16 %v58
  %v227 = vunpack.c.l.b16 %v59
  %v228 = vunpack.c.l.b16 %v60
  %v229 = vunpack.c.l.b16 %v61
  %v230 = vunpack.c.l.b16 %v62
  %v231 = vunpack.c.l.b16 %v63
  %v232 = vunpack.c.l.b16 %v64
  %v233 = vunpack.c.l.b16 %v65
  %v234 = vunpack.c.l.b16 %v66
  %v235 = vunpack.c.l.b16 %v67
  %v236 = vunpack.c.l.b16 %v68
  %v237 = vunpack.c.l.b16 %v69
  %v238 = vunpack.c.l.b16 %v70
  %v239 = vunpack.c.l.b16 %v71
  %v240 = vunpack.c.l.b16 %v72
  %v241 = vunpack.c.l.b16 %v73
  %v242 = vunpack.c.l.b16 %v74
  %v243 = vunpack.c.l.b16 %v75
  %v244 = vunpack.c.l.b16 %v76
  %v245 = vunpack.c.l.b16 %v77
  %v246 = vunpack.c.l.b16 %v78
  %v247 = vunpack.c.l.b16 %v79
  %v248 = vunpack.c.l.b16 %v80
  %v249 = vunpack.c.l.b16 %v81
  %v250 = vunpack.c.l.b16 %v82
  %v251 = vunpack.c.l.b16 %v83
  %v252 = vunpack.c.l.b16 %v84
  %v253 = vunpack.c.l.b16 %v85
  %v254 = vpack.c.b16 %v191, %v190
  %v255 = vpack.c.b16 %v193, %v192
  %v256 = vpack.c.b16 %v195, %v194
  %v257 = vpack.c.b16 %v197, %v196
  %v258 = vpack.c.b16 %v199, %v198
  %v259 = vpack.c.b16 %v201, %v200
  %v260 = vpack.c.b16 %v203, %v202
  %v261 = vpack.c.b16 %v205, %v204
  %v262 = vpack.c.b16 %v207, %v206
  %v263 = vpack.c.b16 %v209, %v208
  %v264 = vpack.c.b16 %v211, %v210
  %v265 = vpack.c.b16 %v213, %v212
  %v266 = vpack.c.b16 %v215, %v214
  %v267 = vpack.c.b16 %v217, %v216
  %v268 = vpack.c.b16 %v219, %v218
  %v269 = vpack.c.b16 %v221, %v220
  %v270 = vpack.c.b16 %v223, %v222
  %v271 = vpack.c.b16 %v225, %v224
  %v272 = vpack.c.b16 %v227, %v226
  %v273 = vpack.c.b16 %v229, %v228
  %v274 = vpack.c.b16 %v231, %v230
  %v275 = vpack.c.b16 %v233, %v232
  %v276 = vpack.c.b16 %v235, %v234
  %v277 = vpack.c.b16 %v237, %v236
  %v278 = vpack.c.b16 %v239, %v238
  %v279 = vpack.c.b16 %v241, %v240
  %v280 = vpack.c.b16 %v243, %v242
  %v281 = vpack.c.b16 %v245, %v244
  %v282 = vpack.c.b16 %v247, %v246
  %v283 = vpack.c.b16 %v249, %v248
  %v284 = vpack.c.b16 %v251, %v250
  %v285 = vpack.c.b16 %v253, %v252
  %318 = vmatprep.subr.bf16.mxu0 0
  %319 = vmatpush1.bf16.msra.mxu0 %v261
  %320 = vmatprep.subr.bf16.mxu0 0
  %321 = vmatpush1.bf16.msra.mxu0 %v260
  %322 = vmatprep.subr.bf16.mxu0 0
  %323 = vmatpush1.bf16.msra.mxu0 %v259
  %324 = vmatprep.subr.bf16.mxu0 0
  %325 = vmatpush1.bf16.msra.mxu0 %v258
  %326 = vmatprep.subr.bf16.mxu0 0
  %327 = vmatpush1.bf16.msra.mxu0 %v257
  %328 = vmatprep.subr.bf16.mxu0 0
  %329 = vmatpush1.bf16.msra.mxu0 %v256
  %330 = vmatprep.subr.bf16.mxu0 0
  %331 = vmatpush1.bf16.msra.mxu0 %v255
  %332 = vmatprep.subr.bf16.mxu0 0
  %333 = vmatpush1.bf16.msra.mxu0 %v254
  %334 = vmatprep.subr.bf16.mxu0 0
  %335 = vmatpush2.bf16.msra.mxu0 %v269
  %336 = vmatprep.subr.bf16.mxu0 0
  %337 = vmatpush2.bf16.msra.mxu0 %v268
  %338 = vmatprep.subr.bf16.mxu0 0
  %339 = vmatpush2.bf16.msra.mxu0 %v267
  %340 = vmatprep.subr.bf16.mxu0 0
  %341 = vmatpush2.bf16.msra.mxu0 %v266
  %342 = vmatprep.subr.bf16.mxu0 0
  %343 = vmatpush2.bf16.msra.mxu0 %v265
  %344 = vmatprep.subr.bf16.mxu0 0
  %345 = vmatpush2.bf16.msra.mxu0 %v264
  %346 = vmatprep.subr.bf16.mxu0 0
  %347 = vmatpush2.bf16.msra.mxu0 %v263
  %348 = vmatprep.subr.bf16.mxu0 0
  %349 = vmatpush2.bf16.msra.mxu0 %v262
  %350 = vmatprep.mubr.bf16.mxu0 %v111
  %351 = vmatmul.mubr.bf16.gmra.mxu0 %v110
  %v352 = vpop.f32.mrf.mxu0
  %v353 = vadd.f32 0.0, %v352
  %v354 = vpop.f32.mrf.mxu0
  %v355 = vpop.f32.mrf.mxu0
  %v356 = vadd.f32 0.0, %v355
  %v357 = vpop.f32.mrf.mxu0
  %358 = vmatprep.mubr.bf16.mxu0 %v115
  %359 = vmatmul.mubr.bf16.gmra.mxu0 %v114
  %v360 = vpop.f32.mrf.mxu0
  %v361 = vadd.f32 0.0, %v360
  %v362 = vpop.f32.mrf.mxu0
  %v363 = vpop.f32.mrf.mxu0
  %v364 = vadd.f32 0.0, %v363
  %v365 = vpop.f32.mrf.mxu0
  %366 = vdwg.mxu0
  %367 = vmatprep.subr.bf16.mxu0 0
  %368 = vmatpush1.bf16.msra.mxu0 %v277
  %369 = vmatprep.subr.bf16.mxu0 0
  %370 = vmatpush1.bf16.msra.mxu0 %v276
  %371 = vmatprep.subr.bf16.mxu0 0
  %372 = vmatpush1.bf16.msra.mxu0 %v275
  %373 = vmatprep.subr.bf16.mxu0 0
  %374 = vmatpush1.bf16.msra.mxu0 %v274
  %375 = vmatprep.subr.bf16.mxu0 0
  %376 = vmatpush1.bf16.msra.mxu0 %v273
  %377 = vmatprep.subr.bf16.mxu0 0
  %378 = vmatpush1.bf16.msra.mxu0 %v272
  %379 = vmatprep.subr.bf16.mxu0 0
  %380 = vmatpush1.bf16.msra.mxu0 %v271
  %381 = vmatprep.subr.bf16.mxu0 0
  %382 = vmatpush1.bf16.msra.mxu0 %v270
  %383 = vmatprep.subr.bf16.mxu0 0
  %384 = vmatpush2.bf16.msra.mxu0 %v285
  %385 = vmatprep.subr.bf16.mxu0 0
  %386 = vmatpush2.bf16.msra.mxu0 %v284
  %387 = vmatprep.subr.bf16.mxu0 0
  %388 = vmatpush2.bf16.msra.mxu0 %v283
  %389 = vmatprep.subr.bf16.mxu0 0
  %390 = vmatpush2.bf16.msra.mxu0 %v282
  %391 = vmatprep.subr.bf16.mxu0 0
  %392 = vmatpush2.bf16.msra.mxu0 %v281
  %393 = vmatprep.subr.bf16.mxu0 0
  %394 = vmatpush2.bf16.msra.mxu0 %v280
  %395 = vmatprep.subr.bf16.mxu0 0
  %396 = vmatpush2.bf16.msra.mxu0 %v279
  %397 = vmatprep.subr.bf16.mxu0 0
  %398 = vmatpush2.bf16.msra.mxu0 %v278
  %399 = vmatprep.mubr.bf16.mxu0 %v113
  %400 = vmatmul.mubr.bf16.gmra.mxu0 %v112
  %v401 = vpop.f32.mrf.mxu0
  %v402 = vadd.f32 %v353, %v401
  %v403 = vpop.f32.mrf.mxu0
  %v404 = vpop.f32.mrf.mxu0
  %v405 = vadd.f32 %v356, %v404
  %v406 = vpop.f32.mrf.mxu0
  %407 = vmatprep.mubr.bf16.mxu0 %v117
  %408 = vmatmul.mubr.bf16.gmra.mxu0 %v116
  %v409 = vpop.f32.mrf.mxu0
  %v410 = vadd.f32 %v361, %v409
  %v411 = vpop.f32.mrf.mxu0
  %v412 = vpop.f32.mrf.mxu0
  %v413 = vadd.f32 %v364, %v412
  %v414 = vpop.f32.mrf.mxu0
  %415 = vdwg.mxu0
  %416 = vst [vmem:[%s2] sm:$0xff] %v402
  %417 = vst [vmem:[%s2 + $0x8] sm:$0xff] %v405
  %418 = vst [vmem:[%s2 + $0x10] sm:$0xff] %v410
  %419 = vst [vmem:[%s2 + $0x18] sm:$0xff] %v413
  %v420 = vadd.f32 %v402, %v405
  %v421 = vadd.f32 %v420, %v410
  %v422 = vadd.f32 %v421, %v413
  %v423 = vrot.slane %v422, 4
  %v424 = vadd.f32 %v422, %v423
  %v425 = vrot.slane %v424, 2
  %v426 = vadd.f32 %v424, %v425
  %v427 = vrot.slane %v426, 1
  %v428 = vadd.f32 %v426, %v427
  %v429 = vmul.f32 %v402, %v402
  %v430 = vmul.f32 %v405, %v405
  %v431 = vmul.f32 %v410, %v410
  %v432 = vmul.f32 %v413, %v413
  %v433 = vadd.f32 %v429, %v430
  %v434 = vadd.f32 %v433, %v431
  %v435 = vadd.f32 %v434, %v432
  %v436 = vrot.slane %v435, 4
  %v437 = vadd.f32 %v435, %v436
  %v438 = vrot.slane %v437, 2
  %v439 = vadd.f32 %v437, %v438
  %v440 = vrot.slane %v439, 1
  %v441 = vadd.f32 %v439, %v440
  %vm442 = vcmask 1040384
  %v443 = vsel %vm442, %v428, %v441
  %vm444 = vcmask 1041408
  %v445 = vsel %vm444, %v443, 0.0
  %446 = vst [vmem:[%s3] sm:$0xff] %v445
  // Predicated region
  $region10: #{_lambda_.13} parent=0 // pred_check
    _
  $region11: #{_lambda_.13} parent=0 // pred_check_branch
    %448 = sbr.rel (0) target = $region13
  $region12: #{_lambda_.13} parent=0 // pred_region
    _
  $region13: #{_lambda_.13} parent=0 // pred_fallthru
    _
  // Predicated region
  $region14: #{_lambda_.13} parent=0 // pred_check
    _
  $region15: #{_lambda_.13} parent=0 // pred_check_branch
    %450 = sbr.rel (0) target = $region17
  $region16: #{_lambda_.13} parent=0 // pred_region
    _
  $region17: #{_lambda_.13} parent=0 // pred_fallthru
    _
  // Predicated region
  $region18: #{_lambda_.13} parent=0 // pred_check
    _
  $region19: #{_lambda_.13} parent=0 // pred_check_branch
    %452 = sbr.rel (0) target = $region21
  $region20: #{_lambda_.13} parent=0 // pred_region
    _
  $region21: #{_lambda_.13} parent=0 // pred_fallthru
    _
  // Predicated region
  $region22: #{_lambda_.13} parent=0 // pred_check
    _
  $region23: #{_lambda_.13} parent=0 // pred_check_branch
    %454 = sbr.rel (0) target = $region25
  $region24: #{_lambda_.13} parent=0 // pred_region
    _
  $region25: #{_lambda_.13} parent=0 // pred_fallthru
    _

// kernel: _lambda_.15
$region0: #{_lambda_.15}
  #allocation0 [shape = 'u32[]', space=smem, size = 0x4, offset = 0x4, fixed_abs, tag = 'smem constant byte address 0x4 - core index']
  #allocation1 [shape = 'u32[144,128]{1,0:T(1,128)}', space=vmem, size = 0x12000, scoped, tag = 'internal scratch']
  %s0 = inlined_call_operand.vmem [shape: bf16[16,1024], index: 0, kind: input, shape index: {}]
  %s1 = inlined_call_operand.vmem [shape: bf16[1024,128], index: 1, kind: input, shape index: {}]
  %s2 = inlined_call_operand.vmem [shape: f32[1,128], index: 2, kind: input, shape index: {}]
  %s3 = inlined_call_operand.vmem [shape: f32[16,128], index: 3, kind: output, shape index: {}]
  %s4 = sld [smem:[#allocation0]]
  $region22: #{_lambda_.15} parent=0
    _
  %s6 = ssub.s32 1, %s4
  %s7 = scalar_select 0, %s6, %s4
  // Predicated region
  $region2: #{_lambda_.15} parent=0 // pred_check
    _
  $region3: #{_lambda_.15} parent=0 // pred_check_branch
    %9 = sbr.rel (0) target = $region5
  $region4: #{_lambda_.15} parent=0 // pred_region
    _
  $region5: #{_lambda_.15} parent=0 // pred_fallthru
    _
  // Predicated region
  $region6: #{_lambda_.15} parent=0 // pred_check
    _
  $region7: #{_lambda_.15} parent=0 // pred_check_branch
    %11 = sbr.rel (0) target = $region9
  $region8: #{_lambda_.15} parent=0 // pred_region
    _
  $region9: #{_lambda_.15} parent=0 // pred_fallthru
    _
  // Predicated region
  $region10: #{_lambda_.15} parent=0 // pred_check
    _
  $region11: #{_lambda_.15} parent=0 // pred_check_branch
    %13 = sbr.rel (0) target = $region13
  $region12: #{_lambda_.15} parent=0 // pred_region
    _
  $region13: #{_lambda_.15} parent=0 // pred_fallthru
    _
  %v15 = vld [vmem:[%s0] sm:$0xff]
  %v16 = vld [vmem:[%s0 + $0x8] sm:$0xff]
  %v17 = vld [vmem:[%s0 + $0x10] sm:$0xff]
  %v18 = vld [vmem:[%s0 + $0x18] sm:$0xff]
  %v19 = vld [vmem:[%s0 + $0x20] sm:$0xff]
  %v20 = vld [vmem:[%s0 + $0x28] sm:$0xff]
  %v21 = vld [vmem:[%s0 + $0x30] sm:$0xff]
  %v22 = vld [vmem:[%s0 + $0x38] sm:$0xff]
  %v23 = vld [vmem:[%s1] sm:$0xf]
  %v24 = vld [vmem:[%s1 + $0x4] sm:$0xf]
  %v25 = vld [vmem:[%s1 + $0x8] sm:$0xf]
  %v26 = vld [vmem:[%s1 + $0xc] sm:$0xf]
  %v27 = vld [vmem:[%s1 + $0x10] sm:$0xf]
  %v28 = vld [vmem:[%s1 + $0x14] sm:$0xf]
  %v29 = vld [vmem:[%s1 + $0x18] sm:$0xf]
  %v30 = vld [vmem:[%s1 + $0x1c] sm:$0xf]
  %v31 = vld [vmem:[%s1 + $0x20] sm:$0xf]
  %v32 = vld [vmem:[%s1 + $0x24] sm:$0xf]
  %v33 = vld [vmem:[%s1 + $0x28] sm:$0xf]
  %v34 = vld [vmem:[%s1 + $0x2c] sm:$0xf]
  %v35 = vld [vmem:[%s1 + $0x30] sm:$0xf]
  %v36 = vld [vmem:[%s1 + $0x34] sm:$0xf]
  %v37 = vld [vmem:[%s1 + $0x38] sm:$0xf]
  %v38 = vld [vmem:[%s1 + $0x3c] sm:$0xf]
  %v39 = vld [vmem:[%s1 + $0x40] sm:$0xf]
  %v40 = vld [vmem:[%s1 + $0x44] sm:$0xf]
  %v41 = vld [vmem:[%s1 + $0x48] sm:$0xf]
  %v42 = vld [vmem:[%s1 + $0x4c] sm:$0xf]
  %v43 = vld [vmem:[%s1 + $0x50] sm:$0xf]
  %v44 = vld [vmem:[%s1 + $0x54] sm:$0xf]
  %v45 = vld [vmem:[%s1 + $0x58] sm:$0xf]
  %v46 = vld [vmem:[%s1 + $0x5c] sm:$0xf]
  %v47 = vld [vmem:[%s1 + $0x60] sm:$0xf]
  %v48 = vld [vmem:[%s1 + $0x64] sm:$0xf]
  %v49 = vld [vmem:[%s1 + $0x68] sm:$0xf]
  %v50 = vld [vmem:[%s1 + $0x6c] sm:$0xf]
  %v51 = vld [vmem:[%s1 + $0x70] sm:$0xf]
  %v52 = vld [vmem:[%s1 + $0x74] sm:$0xf]
  %v53 = vld [vmem:[%s1 + $0x78] sm:$0xf]
  %v54 = vld [vmem:[%s1 + $0x7c] sm:$0xf]
  %v55 = vld [vmem:[%s1 + $0x80] sm:$0xf]
  %v56 = vld [vmem:[%s1 + $0x84] sm:$0xf]
  %v57 = vld [vmem:[%s1 + $0x88] sm:$0xf]
  %v58 = vld [vmem:[%s1 + $0x8c] sm:$0xf]
  %v59 = vld [vmem:[%s1 + $0x90] sm:$0xf]
  %v60 = vld [vmem:[%s1 + $0x94] sm:$0xf]
  %v61 = vld [vmem:[%s1 + $0x98] sm:$0xf]
  %v62 = vld [vmem:[%s1 + $0x9c] sm:$0xf]
  %v63 = vld [vmem:[%s1 + $0xa0] sm:$0xf]
  %v64 = vld [vmem:[%s1 + $0xa4] sm:$0xf]
  %v65 = vld [vmem:[%s1 + $0xa8] sm:$0xf]
  %v66 = vld [vmem:[%s1 + $0xac] sm:$0xf]
  %v67 = vld [vmem:[%s1 + $0xb0] sm:$0xf]
  %v68 = vld [vmem:[%s1 + $0xb4] sm:$0xf]
  %v69 = vld [vmem:[%s1 + $0xb8] sm:$0xf]
  %v70 = vld [vmem:[%s1 + $0xbc] sm:$0xf]
  %v71 = vld [vmem:[%s1 + $0xc0] sm:$0xf]
  %v72 = vld [vmem:[%s1 + $0xc4] sm:$0xf]
  %v73 = vld [vmem:[%s1 + $0xc8] sm:$0xf]
  %v74 = vld [vmem:[%s1 + $0xcc] sm:$0xf]
  %v75 = vld [vmem:[%s1 + $0xd0] sm:$0xf]
  %v76 = vld [vmem:[%s1 + $0xd4] sm:$0xf]
  %v77 = vld [vmem:[%s1 + $0xd8] sm:$0xf]
  %v78 = vld [vmem:[%s1 + $0xdc] sm:$0xf]
  %v79 = vld [vmem:[%s1 + $0xe0] sm:$0xf]
  %v80 = vld [vmem:[%s1 + $0xe4] sm:$0xf]
  %v81 = vld [vmem:[%s1 + $0xe8] sm:$0xf]
  %v82 = vld [vmem:[%s1 + $0xec] sm:$0xf]
  %v83 = vld [vmem:[%s1 + $0xf0] sm:$0xf]
  %v84 = vld [vmem:[%s1 + $0xf4] sm:$0xf]
  %v85 = vld [vmem:[%s1 + $0xf8] sm:$0xf]
  %v86 = vld [vmem:[%s1 + $0xfc] sm:$0xf]
  %v87 = vld [vmem:[%s1 + $0x100] sm:$0xf]
  %v88 = vld [vmem:[%s1 + $0x104] sm:$0xf]
  %v89 = vld [vmem:[%s1 + $0x108] sm:$0xf]
  %v90 = vld [vmem:[%s1 + $0x10c] sm:$0xf]
  %v91 = vld [vmem:[%s1 + $0x110] sm:$0xf]
  %v92 = vld [vmem:[%s1 + $0x114] sm:$0xf]
  %v93 = vld [vmem:[%s1 + $0x118] sm:$0xf]
  %v94 = vld [vmem:[%s1 + $0x11c] sm:$0xf]
  %v95 = vld [vmem:[%s1 + $0x120] sm:$0xf]
  %v96 = vld [vmem:[%s1 + $0x124] sm:$0xf]
  %v97 = vld [vmem:[%s1 + $0x128] sm:$0xf]
  %v98 = vld [vmem:[%s1 + $0x12c] sm:$0xf]
  %v99 = vld [vmem:[%s1 + $0x130] sm:$0xf]
  %v100 = vld [vmem:[%s1 + $0x134] sm:$0xf]
  %v101 = vld [vmem:[%s1 + $0x138] sm:$0xf]
  %v102 = vld [vmem:[%s1 + $0x13c] sm:$0xf]
  %v103 = vld [vmem:[%s1 + $0x140] sm:$0xf]
  %v104 = vld [vmem:[%s1 + $0x144] sm:$0xf]
  %v105 = vld [vmem:[%s1 + $0x148] sm:$0xf]
  %v106 = vld [vmem:[%s1 + $0x14c] sm:$0xf]
  %v107 = vld [vmem:[%s1 + $0x150] sm:$0xf]
  %v108 = vld [vmem:[%s1 + $0x154] sm:$0xf]
  %v109 = vld [vmem:[%s1 + $0x158] sm:$0xf]
  %v110 = vld [vmem:[%s1 + $0x15c] sm:$0xf]
  %v111 = vld [vmem:[%s1 + $0x160] sm:$0xf]
  %v112 = vld [vmem:[%s1 + $0x164] sm:$0xf]
  %v113 = vld [vmem:[%s1 + $0x168] sm:$0xf]
  %v114 = vld [vmem:[%s1 + $0x16c] sm:$0xf]
  %v115 = vld [vmem:[%s1 + $0x170] sm:$0xf]
  %v116 = vld [vmem:[%s1 + $0x174] sm:$0xf]
  %v117 = vld [vmem:[%s1 + $0x178] sm:$0xf]
  %v118 = vld [vmem:[%s1 + $0x17c] sm:$0xf]
  %v119 = vld [vmem:[%s1 + $0x180] sm:$0xf]
  %v120 = vld [vmem:[%s1 + $0x184] sm:$0xf]
  %v121 = vld [vmem:[%s1 + $0x188] sm:$0xf]
  %v122 = vld [vmem:[%s1 + $0x18c] sm:$0xf]
  %v123 = vld [vmem:[%s1 + $0x190] sm:$0xf]
  %v124 = vld [vmem:[%s1 + $0x194] sm:$0xf]
  %v125 = vld [vmem:[%s1 + $0x198] sm:$0xf]
  %v126 = vld [vmem:[%s1 + $0x19c] sm:$0xf]
  %v127 = vld [vmem:[%s1 + $0x1a0] sm:$0xf]
  %v128 = vld [vmem:[%s1 + $0x1a4] sm:$0xf]
  %v129 = vld [vmem:[%s1 + $0x1a8] sm:$0xf]
  %v130 = vld [vmem:[%s1 + $0x1ac] sm:$0xf]
  %v131 = vld [vmem:[%s1 + $0x1b0] sm:$0xf]
  %v132 = vld [vmem:[%s1 + $0x1b4] sm:$0xf]
  %v133 = vld [vmem:[%s1 + $0x1b8] sm:$0xf]
  %v134 = vld [vmem:[%s1 + $0x1bc] sm:$0xf]
  %v135 = vld [vmem:[%s1 + $0x1c0] sm:$0xf]
  %v136 = vld [vmem:[%s1 + $0x1c4] sm:$0xf]
  %v137 = vld [vmem:[%s1 + $0x1c8] sm:$0xf]
  %v138 = vld [vmem:[%s1 + $0x1cc] sm:$0xf]
  %v139 = vld [vmem:[%s1 + $0x1d0] sm:$0xf]
  %v140 = vld [vmem:[%s1 + $0x1d4] sm:$0xf]
  %v141 = vld [vmem:[%s1 + $0x1d8] sm:$0xf]
  %v142 = vld [vmem:[%s1 + $0x1dc] sm:$0xf]
  %v143 = vld [vmem:[%s1 + $0x1e0] sm:$0xf]
  %v144 = vld [vmem:[%s1 + $0x1e4] sm:$0xf]
  %v145 = vld [vmem:[%s1 + $0x1e8] sm:$0xf]
  %v146 = vld [vmem:[%s1 + $0x1ec] sm:$0xf]
  %v147 = vld [vmem:[%s1 + $0x1f0] sm:$0xf]
  %v148 = vld [vmem:[%s1 + $0x1f4] sm:$0xf]
  %v149 = vld [vmem:[%s1 + $0x1f8] sm:$0xf]
  %v150 = vld [vmem:[%s1 + $0x1fc] sm:$0xf]
  %v151 = vld [vmem:[%s2] sm:$0x1]
  %v153 = vlaneseq
  %v154 = vshrl.u32 %v153, 7
  %v155 = vsub.s32 0, %v154
  %v156 = vrot.slane %v151, %v155
  %v166 = vunpack.c.l.b16 %v15
  %v167 = vunpack.c.h.b16 %v15
  %v168 = vunpack.c.l.b16 %v16
  %v169 = vunpack.c.h.b16 %v16
  %v170 = vunpack.c.l.b16 %v17
  %v171 = vunpack.c.h.b16 %v17
  %v172 = vunpack.c.l.b16 %v18
  %v173 = vunpack.c.h.b16 %v18
  %v174 = vunpack.c.l.b16 %v19
  %v175 = vunpack.c.h.b16 %v19
  %v176 = vunpack.c.l.b16 %v20
  %v177 = vunpack.c.h.b16 %v20
  %v178 = vunpack.c.l.b16 %v21
  %v179 = vunpack.c.h.b16 %v21
  %v180 = vunpack.c.l.b16 %v22
  %v181 = vunpack.c.h.b16 %v22
  %v182 = vpack.c.b16 %v174, %v166
  %v183 = vpack.c.b16 %v175, %v167
  %v184 = vpack.c.b16 %v176, %v168
  %v185 = vpack.c.b16 %v177, %v169
  %v186 = vpack.c.b16 %v178, %v170
  %v187 = vpack.c.b16 %v179, %v171
  %v188 = vpack.c.b16 %v180, %v172
  %v189 = vpack.c.b16 %v181, %v173
  %v326 = vunpack.c.l.b16 %v23
  %v327 = vunpack.c.l.b16 %v24
  %v328 = vunpack.c.l.b16 %v25
  %v329 = vunpack.c.l.b16 %v26
  %v330 = vunpack.c.l.b16 %v27
  %v331 = vunpack.c.l.b16 %v28
  %v332 = vunpack.c.l.b16 %v29
  %v333 = vunpack.c.l.b16 %v30
  %v334 = vunpack.c.l.b16 %v31
  %v335 = vunpack.c.l.b16 %v32
  %v336 = vunpack.c.l.b16 %v33
  %v337 = vunpack.c.l.b16 %v34
  %v338 = vunpack.c.l.b16 %v35
  %v339 = vunpack.c.l.b16 %v36
  %v340 = vunpack.c.l.b16 %v37
  %v341 = vunpack.c.l.b16 %v38
  %v342 = vunpack.c.l.b16 %v39
  %v343 = vunpack.c.l.b16 %v40
  %v344 = vunpack.c.l.b16 %v41
  %v345 = vunpack.c.l.b16 %v42
  %v346 = vunpack.c.l.b16 %v43
  %v347 = vunpack.c.l.b16 %v44
  %v348 = vunpack.c.l.b16 %v45
  %v349 = vunpack.c.l.b16 %v46
  %v350 = vunpack.c.l.b16 %v47
  %v351 = vunpack.c.l.b16 %v48
  %v352 = vunpack.c.l.b16 %v49
  %v353 = vunpack.c.l.b16 %v50
  %v354 = vunpack.c.l.b16 %v51
  %v355 = vunpack.c.l.b16 %v52
  %v356 = vunpack.c.l.b16 %v53
  %v357 = vunpack.c.l.b16 %v54
  %v358 = vunpack.c.l.b16 %v55
  %v359 = vunpack.c.l.b16 %v56
  %v360 = vunpack.c.l.b16 %v57
  %v361 = vunpack.c.l.b16 %v58
  %v362 = vunpack.c.l.b16 %v59
  %v363 = vunpack.c.l.b16 %v60
  %v364 = vunpack.c.l.b16 %v61
  %v365 = vunpack.c.l.b16 %v62
  %v366 = vunpack.c.l.b16 %v63
  %v367 = vunpack.c.l.b16 %v64
  %v368 = vunpack.c.l.b16 %v65
  %v369 = vunpack.c.l.b16 %v66
  %v370 = vunpack.c.l.b16 %v67
  %v371 = vunpack.c.l.b16 %v68
  %v372 = vunpack.c.l.b16 %v69
  %v373 = vunpack.c.l.b16 %v70
  %v374 = vunpack.c.l.b16 %v71
  %v375 = vunpack.c.l.b16 %v72
  %v376 = vunpack.c.l.b16 %v73
  %v377 = vunpack.c.l.b16 %v74
  %v378 = vunpack.c.l.b16 %v75
  %v379 = vunpack.c.l.b16 %v76
  %v380 = vunpack.c.l.b16 %v77
  %v381 = vunpack.c.l.b16 %v78
  %v382 = vunpack.c.l.b16 %v79
  %v383 = vunpack.c.l.b16 %v80
  %v384 = vunpack.c.l.b16 %v81
  %v385 = vunpack.c.l.b16 %v82
  %v386 = vunpack.c.l.b16 %v83
  %v387 = vunpack.c.l.b16 %v84
  %v388 = vunpack.c.l.b16 %v85
  %v389 = vunpack.c.l.b16 %v86
  %v390 = vunpack.c.l.b16 %v87
  %v391 = vunpack.c.l.b16 %v88
  %v392 = vunpack.c.l.b16 %v89
  %v393 = vunpack.c.l.b16 %v90
  %v394 = vunpack.c.l.b16 %v91
  %v395 = vunpack.c.l.b16 %v92
  %v396 = vunpack.c.l.b16 %v93
  %v397 = vunpack.c.l.b16 %v94
  %v398 = vunpack.c.l.b16 %v95
  %v399 = vunpack.c.l.b16 %v96
  %v400 = vunpack.c.l.b16 %v97
  %v401 = vunpack.c.l.b16 %v98
  %v402 = vunpack.c.l.b16 %v99
  %v403 = vunpack.c.l.b16 %v100
  %v404 = vunpack.c.l.b16 %v101
  %v405 = vunpack.c.l.b16 %v102
  %v406 = vunpack.c.l.b16 %v103
  %v407 = vunpack.c.l.b16 %v104
  %v408 = vunpack.c.l.b16 %v105
  %v409 = vunpack.c.l.b16 %v106
  %v410 = vunpack.c.l.b16 %v107
  %v411 = vunpack.c.l.b16 %v108
  %v412 = vunpack.c.l.b16 %v109
  %v413 = vunpack.c.l.b16 %v110
  %v414 = vunpack.c.l.b16 %v111
  %v415 = vunpack.c.l.b16 %v112
  %v416 = vunpack.c.l.b16 %v113
  %v417 = vunpack.c.l.b16 %v114
  %v418 = vunpack.c.l.b16 %v115
  %v419 = vunpack.c.l.b16 %v116
  %v420 = vunpack.c.l.b16 %v117
  %v421 = vunpack.c.l.b16 %v118
  %v422 = vunpack.c.l.b16 %v119
  %v423 = vunpack.c.l.b16 %v120
  %v424 = vunpack.c.l.b16 %v121
  %v425 = vunpack.c.l.b16 %v122
  %v426 = vunpack.c.l.b16 %v123
  %v427 = vunpack.c.l.b16 %v124
  %v428 = vunpack.c.l.b16 %v125
  %v429 = vunpack.c.l.b16 %v126
  %v430 = vunpack.c.l.b16 %v127
  %v431 = vunpack.c.l.b16 %v128
  %v432 = vunpack.c.l.b16 %v129
  %v433 = vunpack.c.l.b16 %v130
  %v434 = vunpack.c.l.b16 %v131
  %v435 = vunpack.c.l.b16 %v132
  %v436 = vunpack.c.l.b16 %v133
  %v437 = vunpack.c.l.b16 %v134
  %v438 = vunpack.c.l.b16 %v135
  %v439 = vunpack.c.l.b16 %v136
  %v440 = vunpack.c.l.b16 %v137
  %v441 = vunpack.c.l.b16 %v138
  %v442 = vunpack.c.l.b16 %v139
  %v443 = vunpack.c.l.b16 %v140
  %v444 = vunpack.c.l.b16 %v141
  %v445 = vunpack.c.l.b16 %v142
  %v446 = vunpack.c.l.b16 %v143
  %v447 = vunpack.c.l.b16 %v144
  %v448 = vunpack.c.l.b16 %v145
  %v449 = vunpack.c.l.b16 %v146
  %v450 = vunpack.c.l.b16 %v147
  %v451 = vunpack.c.l.b16 %v148
  %v452 = vunpack.c.l.b16 %v149
  %v453 = vunpack.c.l.b16 %v150
  %v454 = vpack.c.b16 %v327, %v326
  %v455 = vpack.c.b16 %v329, %v328
  %v456 = vpack.c.b16 %v331, %v330
  %v457 = vpack.c.b16 %v333, %v332
  %v458 = vpack.c.b16 %v335, %v334
  %v459 = vpack.c.b16 %v337, %v336
  %v460 = vpack.c.b16 %v339, %v338
  %v461 = vpack.c.b16 %v341, %v340
  %v462 = vpack.c.b16 %v343, %v342
  %v463 = vpack.c.b16 %v345, %v344
  %v464 = vpack.c.b16 %v347, %v346
  %v465 = vpack.c.b16 %v349, %v348
  %v466 = vpack.c.b16 %v351, %v350
  %v467 = vpack.c.b16 %v353, %v352
  %v468 = vpack.c.b16 %v355, %v354
  %v469 = vpack.c.b16 %v357, %v356
  %v470 = vpack.c.b16 %v359, %v358
  %v471 = vpack.c.b16 %v361, %v360
  %v472 = vpack.c.b16 %v363, %v362
  %v473 = vpack.c.b16 %v365, %v364
  %v474 = vpack.c.b16 %v367, %v366
  %v475 = vpack.c.b16 %v369, %v368
  %v476 = vpack.c.b16 %v371, %v370
  %v477 = vpack.c.b16 %v373, %v372
  %v478 = vpack.c.b16 %v375, %v374
  %v479 = vpack.c.b16 %v377, %v376
  %v480 = vpack.c.b16 %v379, %v378
  %v481 = vpack.c.b16 %v381, %v380
  %v482 = vpack.c.b16 %v383, %v382
  %v483 = vpack.c.b16 %v385, %v384
  %v484 = vpack.c.b16 %v387, %v386
  %v485 = vpack.c.b16 %v389, %v388
  %v486 = vpack.c.b16 %v391, %v390
  %v487 = vpack.c.b16 %v393, %v392
  %v488 = vpack.c.b16 %v395, %v394
  %v489 = vpack.c.b16 %v397, %v396
  %v490 = vpack.c.b16 %v399, %v398
  %v491 = vpack.c.b16 %v401, %v400
  %v492 = vpack.c.b16 %v403, %v402
  %v493 = vpack.c.b16 %v405, %v404
  %v494 = vpack.c.b16 %v407, %v406
  %v495 = vpack.c.b16 %v409, %v408
  %v496 = vpack.c.b16 %v411, %v410
  %v497 = vpack.c.b16 %v413, %v412
  %v498 = vpack.c.b16 %v415, %v414
  %v499 = vpack.c.b16 %v417, %v416
  %v500 = vpack.c.b16 %v419, %v418
  %v501 = vpack.c.b16 %v421, %v420
  %v502 = vpack.c.b16 %v423, %v422
  %v503 = vpack.c.b16 %v425, %v424
  %v504 = vpack.c.b16 %v427, %v426
  %v505 = vpack.c.b16 %v429, %v428
  %v506 = vpack.c.b16 %v431, %v430
  %v507 = vpack.c.b16 %v433, %v432
  %v508 = vpack.c.b16 %v435, %v434
  %v509 = vpack.c.b16 %v437, %v436
  %v510 = vpack.c.b16 %v439, %v438
  %v511 = vpack.c.b16 %v441, %v440
  %v512 = vpack.c.b16 %v443, %v442
  %v513 = vpack.c.b16 %v445, %v444
  %v514 = vpack.c.b16 %v447, %v446
  %v515 = vpack.c.b16 %v449, %v448
  %v516 = vpack.c.b16 %v451, %v450
  %v517 = vpack.c.b16 %v453, %v452
  %582 = vmatprep.subr.bf16.mxu0 0
  %583 = vmatpush1.bf16.msra.mxu0 %v461
  %584 = vmatprep.subr.bf16.mxu0 0
  %585 = vmatpush1.bf16.msra.mxu0 %v460
  %586 = vmatprep.subr.bf16.mxu0 0
  %587 = vmatpush1.bf16.msra.mxu0 %v459
  %588 = vmatprep.subr.bf16.mxu0 0
  %589 = vmatpush1.bf16.msra.mxu0 %v458
  %590 = vmatprep.subr.bf16.mxu0 0
  %591 = vmatpush1.bf16.msra.mxu0 %v457
  %592 = vmatprep.subr.bf16.mxu0 0
  %593 = vmatpush1.bf16.msra.mxu0 %v456
  %594 = vmatprep.subr.bf16.mxu0 0
  %595 = vmatpush1.bf16.msra.mxu0 %v455
  %596 = vmatprep.subr.bf16.mxu0 0
  %597 = vmatpush1.bf16.msra.mxu0 %v454
  %598 = vmatprep.subr.bf16.mxu0 0
  %599 = vmatpush2.bf16.msra.mxu0 %v469
  %600 = vmatprep.subr.bf16.mxu0 0
  %601 = vmatpush2.bf16.msra.mxu0 %v468
  %602 = vmatprep.subr.bf16.mxu0 0
  %603 = vmatpush2.bf16.msra.mxu0 %v467
  %604 = vmatprep.subr.bf16.mxu0 0
  %605 = vmatpush2.bf16.msra.mxu0 %v466
  %606 = vmatprep.subr.bf16.mxu0 0
  %607 = vmatpush2.bf16.msra.mxu0 %v465
  %608 = vmatprep.subr.bf16.mxu0 0
  %609 = vmatpush2.bf16.msra.mxu0 %v464
  %610 = vmatprep.subr.bf16.mxu0 0
  %611 = vmatpush2.bf16.msra.mxu0 %v463
  %612 = vmatprep.subr.bf16.mxu0 0
  %613 = vmatpush2.bf16.msra.mxu0 %v462
  %614 = vmatprep.mubr.bf16.mxu0 %v183
  %615 = vmatmul.mubr.bf16.gmra.mxu0 %v182
  %v616 = vpop.f32.mrf.mxu0
  %v617 = vadd.f32 %v156, %v616
  %v618 = vpop.f32.mrf.mxu0
  %v619 = vpop.f32.mrf.mxu0
  %v620 = vadd.f32 %v156, %v619
  %v621 = vpop.f32.mrf.mxu0
  %622 = vdwg.mxu0
  %623 = vmatprep.subr.bf16.mxu0 0
  %624 = vmatpush1.bf16.msra.mxu0 %v477
  %625 = vmatprep.subr.bf16.mxu0 0
  %626 = vmatpush1.bf16.msra.mxu0 %v476
  %627 = vmatprep.subr.bf16.mxu0 0
  %628 = vmatpush1.bf16.msra.mxu0 %v475
  %629 = vmatprep.subr.bf16.mxu0 0
  %630 = vmatpush1.bf16.msra.mxu0 %v474
  %631 = vmatprep.subr.bf16.mxu0 0
  %632 = vmatpush1.bf16.msra.mxu0 %v473
  %633 = vmatprep.subr.bf16.mxu0 0
  %634 = vmatpush1.bf16.msra.mxu0 %v472
  %635 = vmatprep.subr.bf16.mxu0 0
  %636 = vmatpush1.bf16.msra.mxu0 %v471
  %637 = vmatprep.subr.bf16.mxu0 0
  %638 = vmatpush1.bf16.msra.mxu0 %v470
  %639 = vmatprep.subr.bf16.mxu0 0
  %640 = vmatpush2.bf16.msra.mxu0 %v485
  %641 = vmatprep.subr.bf16.mxu0 0
  %642 = vmatpush2.bf16.msra.mxu0 %v484
  %643 = vmatprep.subr.bf16.mxu0 0
  %644 = vmatpush2.bf16.msra.mxu0 %v483
  %645 = vmatprep.subr.bf16.mxu0 0
  %646 = vmatpush2.bf16.msra.mxu0 %v482
  %647 = vmatprep.subr.bf16.mxu0 0
  %648 = vmatpush2.bf16.msra.mxu0 %v481
  %649 = vmatprep.subr.bf16.mxu0 0
  %650 = vmatpush2.bf16.msra.mxu0 %v480
  %651 = vmatprep.subr.bf16.mxu0 0
  %652 = vmatpush2.bf16.msra.mxu0 %v479
  %653 = vmatprep.subr.bf16.mxu0 0
  %654 = vmatpush2.bf16.msra.mxu0 %v478
  %655 = vmatprep.mubr.bf16.mxu0 %v185
  %656 = vmatmul.mubr.bf16.gmra.mxu0 %v184
  %v657 = vpop.f32.mrf.mxu0
  %v658 = vadd.f32 %v617, %v657
  %v659 = vpop.f32.mrf.mxu0
  %v660 = vpop.f32.mrf.mxu0
  %v661 = vadd.f32 %v620, %v660
  %v662 = vpop.f32.mrf.mxu0
  %663 = vdwg.mxu0
  %664 = vmatprep.subr.bf16.mxu0 0
  %665 = vmatpush1.bf16.msra.mxu0 %v493
  %666 = vmatprep.subr.bf16.mxu0 0
  %667 = vmatpush1.bf16.msra.mxu0 %v492
  %668 = vmatprep.subr.bf16.mxu0 0
  %669 = vmatpush1.bf16.msra.mxu0 %v491
  %670 = vmatprep.subr.bf16.mxu0 0
  %671 = vmatpush1.bf16.msra.mxu0 %v490
  %672 = vmatprep.subr.bf16.mxu0 0
  %673 = vmatpush1.bf16.msra.mxu0 %v489
  %674 = vmatprep.subr.bf16.mxu0 0
  %675 = vmatpush1.bf16.msra.mxu0 %v488
  %676 = vmatprep.subr.bf16.mxu0 0
  %677 = vmatpush1.bf16.msra.mxu0 %v487
  %678 = vmatprep.subr.bf16.mxu0 0
  %679 = vmatpush1.bf16.msra.mxu0 %v486
  %680 = vmatprep.subr.bf16.mxu0 0
  %681 = vmatpush2.bf16.msra.mxu0 %v501
  %682 = vmatprep.subr.bf16.mxu0 0
  %683 = vmatpush2.bf16.msra.mxu0 %v500
  %684 = vmatprep.subr.bf16.mxu0 0
  %685 = vmatpush2.bf16.msra.mxu0 %v499
  %686 = vmatprep.subr.bf16.mxu0 0
  %687 = vmatpush2.bf16.msra.mxu0 %v498
  %688 = vmatprep.subr.bf16.mxu0 0
  %689 = vmatpush2.bf16.msra.mxu0 %v497
  %690 = vmatprep.subr.bf16.mxu0 0
  %691 = vmatpush2.bf16.msra.mxu0 %v496
  %692 = vmatprep.subr.bf16.mxu0 0
  %693 = vmatpush2.bf16.msra.mxu0 %v495
  %694 = vmatprep.subr.bf16.mxu0 0
  %695 = vmatpush2.bf16.msra.mxu0 %v494
  %696 = vmatprep.mubr.bf16.mxu0 %v187
  %697 = vmatmul.mubr.bf16.gmra.mxu0 %v186
  %v698 = vpop.f32.mrf.mxu0
  %v699 = vadd.f32 %v658, %v698
  %v700 = vpop.f32.mrf.mxu0
  %v701 = vpop.f32.mrf.mxu0
  %v702 = vadd.f32 %v661, %v701
  %v703 = vpop.f32.mrf.mxu0
  %704 = vdwg.mxu0
  %705 = vmatprep.subr.bf16.mxu0 0
  %706 = vmatpush1.bf16.msra.mxu0 %v509
  %707 = vmatprep.subr.bf16.mxu0 0
  %708 = vmatpush1.bf16.msra.mxu0 %v508
  %709 = vmatprep.subr.bf16.mxu0 0
  %710 = vmatpush1.bf16.msra.mxu0 %v507
  %711 = vmatprep.subr.bf16.mxu0 0
  %712 = vmatpush1.bf16.msra.mxu0 %v506
  %713 = vmatprep.subr.bf16.mxu0 0
  %714 = vmatpush1.bf16.msra.mxu0 %v505
  %715 = vmatprep.subr.bf16.mxu0 0
  %716 = vmatpush1.bf16.msra.mxu0 %v504
  %717 = vmatprep.subr.bf16.mxu0 0
  %718 = vmatpush1.bf16.msra.mxu0 %v503
  %719 = vmatprep.subr.bf16.mxu0 0
  %720 = vmatpush1.bf16.msra.mxu0 %v502
  %721 = vmatprep.subr.bf16.mxu0 0
  %722 = vmatpush2.bf16.msra.mxu0 %v517
  %723 = vmatprep.subr.bf16.mxu0 0
  %724 = vmatpush2.bf16.msra.mxu0 %v516
  %725 = vmatprep.subr.bf16.mxu0 0
  %726 = vmatpush2.bf16.msra.mxu0 %v515
  %727 = vmatprep.subr.bf16.mxu0 0
  %728 = vmatpush2.bf16.msra.mxu0 %v514
  %729 = vmatprep.subr.bf16.mxu0 0
  %730 = vmatpush2.bf16.msra.mxu0 %v513
  %731 = vmatprep.subr.bf16.mxu0 0
  %732 = vmatpush2.bf16.msra.mxu0 %v512
  %733 = vmatprep.subr.bf16.mxu0 0
  %734 = vmatpush2.bf16.msra.mxu0 %v511
  %735 = vmatprep.subr.bf16.mxu0 0
  %736 = vmatpush2.bf16.msra.mxu0 %v510
  %737 = vmatprep.mubr.bf16.mxu0 %v189
  %738 = vmatmul.mubr.bf16.gmra.mxu0 %v188
  %v739 = vpop.f32.mrf.mxu0
  %v740 = vadd.f32 %v699, %v739
  %v741 = vpop.f32.mrf.mxu0
  %v742 = vpop.f32.mrf.mxu0
  %v743 = vadd.f32 %v702, %v742
  %v744 = vpop.f32.mrf.mxu0
  %745 = vdwg.mxu0
  %746 = vst [vmem:[%s3] sm:$0xff] %v740
  %747 = vst [vmem:[%s3 + $0x8] sm:$0xff] %v743
  // Predicated region
  $region14: #{_lambda_.15} parent=0 // pred_check
    _
  $region15: #{_lambda_.15} parent=0 // pred_check_branch
    %749 = sbr.rel (0) target = $region17
  $region16: #{_lambda_.15} parent=0 // pred_region
    _
  $region17: #{_lambda_.15} parent=0 // pred_fallthru
    _
  // Predicated region
  $region18: #{_lambda_.15} parent=0 // pred_check
    _
  $region19: #{_lambda_.15} parent=0 // pred_check_branch
    %751 = sbr.rel (0) target = $region21
  $region20: #{_lambda_.15} parent=0 // pred_region
    _
  $region21: #{_lambda_.15} parent=0 // pred_fallthru
    _

</llo_original>
